<compile_context>
chip_gen: v7x
topology: tpu7x:2x2x1
jax: 0.10.0
libtpu: 0.0.40
codegen_flags: <defaults>
</compile_context>

<pallas_src>
import functools

import jax
import jax.numpy as jnp
from jax import lax
from jax.experimental import pallas as pl
from jax.experimental.pallas import tpu as pltpu


def _round_up(x, m):
    return (x + m - 1) // m * m


def _pick_tile(full, cap):
    """Largest tile <= cap that divides `full` (full is a multiple of 128)."""
    t = min(cap, full)
    while full % t:
        t //= 2
    return t


# ---------------------------------------------------------------------------
# Fused Pallas kernel: tiled matmul (bf16 x bf16 -> f32 accumulate) +
# optional BatchNorm (batch statistics) + optional activation.
# Grid = (M_tiles, N_tiles, K_tiles), K innermost.
# ---------------------------------------------------------------------------
def _group_combine(s, groups):
    """s: (1, groups*cp) per-column sums -> per-channel sums, broadcast back.

    Column layout is phase-major (col = phase*cp + channel); summing the
    `groups` phase blocks gives the global per-channel statistic."""
    cp = s.shape[1] // groups
    g = s[:, 0:cp]
    for i in range(1, groups):
        g = g + s[:, i * cp:(i + 1) * cp]
    return jnp.concatenate([g] * groups, axis=1)


def _mm_kernel(a_ref, b_ref, o_ref, acc_ref, *, bn, act, groups, m_valid,
               eps=1e-5):
    @pl.when(pl.program_id(2) == 0)
    def _init():
        acc_ref[...] = jnp.zeros_like(acc_ref)

    acc_ref[...] += jnp.dot(a_ref[...], b_ref[...],
                            preferred_element_type=jnp.float32)

    @pl.when(pl.program_id(2) == pl.num_programs(2) - 1)
    def _finalize():
        y = acc_ref[...]
        if bn:
            # Padded rows of A are zero => those rows of y are zero, so plain
            # column sums with the 1/count factor are exact batch statistics
            # (no row mask needed).
            count = float(groups * m_valid)
            s1 = jnp.sum(y, axis=0, keepdims=True)
            s2 = jnp.sum(y * y, axis=0, keepdims=True)
            if groups > 1:
                s1 = _group_combine(s1, groups)
                s2 = _group_combine(s2, groups)
            mean = s1 * (1.0 / count)
            var = jnp.maximum(s2 * (1.0 / count) - mean * mean, 0.0)
            y = (y - mean) * lax.rsqrt(var + eps)
        if act == "lrelu":
            y = jnp.where(y > 0, y, 0.2 * y)
        elif act == "relu":
            y = jnp.maximum(y, 0.0)
        elif act == "tanh":
            y = jnp.tanh(y)
        o_ref[...] = y.astype(o_ref.dtype)


def matmul_bn_act(a, b, *, bn, act, groups, n_out, out_dtype=jnp.float32):
    """a: [M, K] activations (f32 or bf16); b: [Kp, Np] pre-padded bf16 weight.

    Returns [M, n_out] out_dtype = act(bn(a @ b))."""
    m, kdim = a.shape
    kp, np_ = b.shape

    m8 = _round_up(m, 8)
    if bn:
        # BatchNorm statistics are global over M -> keep all rows resident.
        tm, mp = m8, m8
    else:
        tm = min(512, m8)
        mp = _round_up(m8, tm)
    # Grouped BN (sub-pixel convT) needs the whole phase x channel width in
    # one block; otherwise tile N.
    tn = np_ if groups > 1 else _pick_tile(np_, 256)
    tk = _pick_tile(kp, 256 if bn else 512)

    a_pad = jnp.pad(a.astype(jnp.bfloat16), ((0, mp - m), (0, kp - kdim)))

    kern = functools.partial(_mm_kernel, bn=bn, act=act, groups=groups,
                             m_valid=m)
    out_bytes = jnp.dtype(out_dtype).itemsize
    out = pl.pallas_call(
        kern,
        out_shape=jax.ShapeDtypeStruct((mp, np_), out_dtype),
        grid=(mp // tm, np_ // tn, kp // tk),
        in_specs=[
            pl.BlockSpec((tm, tk), lambda i, j, k: (i, k)),
            pl.BlockSpec((tk, tn), lambda i, j, k: (k, j)),
        ],
        out_specs=pl.BlockSpec((tm, tn), lambda i, j, k: (i, j)),
        scratch_shapes=[pltpu.VMEM((tm, tn), jnp.float32)],
        compiler_params=pltpu.CompilerParams(
            dimension_semantics=("parallel", "parallel", "arbitrary"),
            vmem_limit_bytes=48 * 1024 * 1024,
        ),
        cost_estimate=pl.CostEstimate(
            flops=2 * mp * np_ * kp,
            transcendentals=mp * np_ if act == "tanh" else 0,
            bytes_accessed=2 * (mp * kp + kp * np_) + out_bytes * mp * np_,
        ),
    )(a_pad, b)
    if mp == m and np_ == n_out:
        return out
    return out[:m, :n_out]


# ---------------------------------------------------------------------------
# NHWC im2col glue + layer application
# ---------------------------------------------------------------------------
def _im2col_nhwc(x, k, stride, pad):
    n, h, w, c = x.shape
    if pad:
        x = jnp.pad(x, ((0, 0), (pad, pad), (pad, pad), (0, 0)))
    ho = (h + 2 * pad - k) // stride + 1
    wo = (w + 2 * pad - k) // stride + 1
    patches = [
        x[:, di:di + (ho - 1) * stride + 1:stride,
          dj:dj + (wo - 1) * stride + 1:stride, :]
        for di in range(k) for dj in range(k)
    ]
    cols = jnp.concatenate(patches, axis=-1)        # (N, Ho, Wo, k*k*C)
    return cols.reshape(n * ho * wo, k * k * c), ho, wo


def _conv_layer(x, b, cfg):
    n = x.shape[0]
    cols, ho, wo = _im2col_nhwc(x, cfg["k"], cfg["stride"], cfg["pad"])
    y = matmul_bn_act(cols, b, bn=cfg["bn"], act=cfg["act"], groups=1,
                      n_out=cfg["cout"], out_dtype=cfg["out_dtype"])
    return y.reshape(n, ho, wo, cfg["cout"])


def _convt2_layer(x, b, cfg):
    """Stride-2, pad-1, 4x4 ConvTranspose2d via sub-pixel decomposition."""
    n, h, w, _ = x.shape
    cout, cp = cfg["cout"], cfg["cp"]
    cols, _, _ = _im2col_nhwc(x, 3, 1, 1)            # 3x3 patches, un-dilated input
    y = matmul_bn_act(cols, b, bn=cfg["bn"], act=cfg["act"], groups=4,
                      n_out=4 * cp, out_dtype=cfg["out_dtype"])
    y = y.reshape(n, h, w, 2, 2, cp)[..., :cout]     # (N, H, W, rh, rw, Cout)
    y = jnp.transpose(y, (0, 1, 3, 2, 4, 5))         # (N, H, rh, W, rw, Cout)
    return y.reshape(n, 2 * h, 2 * w, cout)


# ---------------------------------------------------------------------------
# Parameter construction (weight transforms folded in at build time)
# ---------------------------------------------------------------------------
_SCALE = 0.02  # DCGAN-style init


def _pad_weight(b):
    k, n = b.shape
    kp, np_ = _round_up(k, 128), _round_up(n, 128)
    return jnp.pad(b, ((0, kp - k), (0, np_ - n))).astype(jnp.bfloat16)


def _make_conv_w(key, cout, cin, k):
    """PyTorch Conv2d(cin->cout, k) weight -> padded bf16 [k*k*cin, cout]."""
    w = _SCALE * jax.random.normal(key, (cout, cin, k, k), jnp.float32)
    b = jnp.transpose(w, (2, 3, 1, 0)).reshape(k * k * cin, cout)
    return _pad_weight(b)


def _make_convt1_w(key, cin, cout, k):
    """Stride-1 ConvTranspose2d == conv with spatially flipped, channel-swapped
    weight; the flip is folded in here (build time)."""
    w = _SCALE * jax.random.normal(key, (cin, cout, k, k), jnp.float32)
    b = jnp.transpose(w[:, :, ::-1, ::-1], (2, 3, 0, 1)).reshape(k * k * cin, cout)
    return _pad_weight(b)


# kernel tap used by each (phase, 3x3-patch-offset) pair for a stride-2,
# pad-1, 4x4 transposed conv (per spatial axis).
_SUBPIX_TAP = {0: {0: 3, 1: 1}, 1: {1: 2, 2: 0}}


def _make_convt2_w(key, cin, cout):
    """Stride-2 pad-1 4x4 ConvTranspose2d -> padded bf16 [9*cin, 4*cp] sub-pixel weight."""
    w = _SCALE * jax.random.normal(key, (cin, cout, 4, 4), jnp.float32)
    cp = _round_up(cout, 32)                        # 4*cp is a multiple of 128
    b = jnp.zeros((9 * cin, 4 * cp), jnp.float32)
    for rh in (0, 1):
        for rw in (0, 1):
            p = rh * 2 + rw
            for a in range(3):
                for c in range(3):
                    if a in _SUBPIX_TAP[rh] and c in _SUBPIX_TAP[rw]:
                        u, v = _SUBPIX_TAP[rh][a], _SUBPIX_TAP[rw][c]
                        r0 = (a * 3 + c) * cin
                        b = b.at[r0:r0 + cin, p * cp:p * cp + cout].set(w[:, :, u, v])
    return _pad_weight(b), cp


def _finalize_dtypes(cfgs):
    """Intermediate layers write bf16 (halve activation HBM traffic); the last
    layer of each sub-network (a returned tensor) stays f32."""
    for i, cfg in enumerate(cfgs):
        cfg["out_dtype"] = jnp.float32 if i == len(cfgs) - 1 else jnp.bfloat16
    return cfgs


def make_encoder(key, isize, nz, nc, ndf):
    assert isize % 16 == 0, "isize has to be a multiple of 16"
    keys = jax.random.split(key, 16)
    ki = 0
    cfgs, weights = [], []
    # initial conv + LeakyReLU(0.2)
    weights.append(_make_conv_w(keys[ki], ndf, nc, 4)); ki += 1
    cfgs.append(dict(kind="conv", k=4, stride=2, pad=1, cout=ndf,
                     bn=False, act="lrelu"))
    csize, cndf = isize // 2, ndf
    while csize > 4:
        weights.append(_make_conv_w(keys[ki], cndf * 2, cndf, 4)); ki += 1
        cfgs.append(dict(kind="conv", k=4, stride=2, pad=1, cout=cndf * 2,
                         bn=True, act="lrelu"))
        cndf *= 2
        csize //= 2
    # final conv -> nz x 1 x 1
    weights.append(_make_conv_w(keys[ki], nz, cndf, 4)); ki += 1
    cfgs.append(dict(kind="conv", k=4, stride=1, pad=0, cout=nz,
                     bn=False, act=None))
    return _finalize_dtypes(cfgs), tuple(weights)


def make_decoder(key, isize, nz, nc, ngf):
    assert isize % 16 == 0, "isize has to be a multiple of 16"
    keys = jax.random.split(key, 16)
    ki = 0
    cngf, tisize = ngf // 2, 4
    while tisize != isize:
        cngf *= 2
        tisize *= 2
    cfgs, weights = [], []
    # initial ConvTranspose2d(nz, cngf, 4, 1, 0) + BN + ReLU
    # (stride 1 -> plain flipped conv with pad = k-1)
    weights.append(_make_convt1_w(keys[ki], nz, cngf, 4)); ki += 1
    cfgs.append(dict(kind="conv", k=4, stride=1, pad=3, cout=cngf,
                     bn=True, act="relu"))
    csize = 4
    while csize < isize // 2:
        b, cp = _make_convt2_w(keys[ki], cngf, cngf // 2); ki += 1
        weights.append(b)
        cfgs.append(dict(kind="convt2", cout=cngf // 2, cp=cp,
                         bn=True, act="relu"))
        cngf //= 2
        csize *= 2
    # final ConvTranspose2d(cngf, nc, 4, 2, 1) + Tanh
    b, cp = _make_convt2_w(keys[ki], cngf, nc); ki += 1
    weights.append(b)
    cfgs.append(dict(kind="convt2", cout=nc, cp=cp, bn=False, act="tanh"))
    return _finalize_dtypes(cfgs), tuple(weights)


def _apply_layers(x, cfgs, weights):
    for cfg, b in zip(cfgs, weights):
        if cfg["kind"] == "conv":
            x = _conv_layer(x, b, cfg)
        else:
            x = _convt2_layer(x, b, cfg)
    return x


def build_forward(cfg_enc1, cfg_dec, cfg_enc2):
    """Static layer configs are closed over; only arrays cross the jit boundary."""
    def fwd(x_nchw, w_enc1, w_dec, w_enc2):
        x = jnp.transpose(x_nchw, (0, 2, 3, 1))             # NCHW -> NHWC once
        latent_i = _apply_layers(x, cfg_enc1, w_enc1)        # (N, 1, 1, nz)
        gen_imag = _apply_layers(latent_i, cfg_dec, w_dec)   # (N, isize, isize, nc)
        latent_o = _apply_layers(gen_imag, cfg_enc2, w_enc2)
        to_nchw = lambda t: jnp.transpose(t, (0, 3, 1, 2))
        return to_nchw(gen_imag), to_nchw(latent_i), to_nchw(latent_o)
    return jax.jit(fwd)


# ---------------------------------------------------------------------------
if __name__ == "__main__":
    # Small but structure-preserving config (isize multiple of 16).
    ISIZE, NC, NZ, NGF, NDF, BATCH = 16, 3, 8, 8, 8, 2

    root = jax.random.PRNGKey(0)
    k_in, k_e1, k_d, k_e2 = jax.random.split(root, 4)

    # NetG passes ngf as the encoders' ndf argument -- mirror that exactly.
    cfg_e1, w_e1 = make_encoder(k_e1, ISIZE, NZ, NC, NGF)
    cfg_d, w_d = make_decoder(k_d, ISIZE, NZ, NC, NGF)
    cfg_e2, w_e2 = make_encoder(k_e2, ISIZE, NZ, NC, NGF)

    x = jax.random.normal(k_in, (BATCH, NC, ISIZE, ISIZE), jnp.float32)

    fwd = build_forward(cfg_e1, cfg_d, cfg_e2)
    gen_imag, latent_i, latent_o = fwd(x, w_e1, w_d, w_e2)
    jax.block_until_ready((gen_imag, latent_i, latent_o))

    assert gen_imag.shape == (BATCH, NC, ISIZE, ISIZE), gen_imag.shape
    assert latent_i.shape == (BATCH, NZ, 1, 1), latent_i.shape
    assert latent_o.shape == (BATCH, NZ, 1, 1), latent_o.shape
    assert bool(jnp.all(jnp.isfinite(gen_imag)))
    assert bool(jnp.all(jnp.abs(gen_imag) <= 1.0))   # tanh output range

    print("KERNEL_OK")
</pallas_src>

<mosaic_0001>
module attributes {stable_mosaic.version = 11 : i64} {
  func.func @_mm_kernel(%arg0: i32, %arg1: i32, %arg2: i32, %arg3: memref<128x128xbf16, #tpu.memory_space<vmem>>, %arg4: memref<128x128xbf16, #tpu.memory_space<vmem>>, %arg5: memref<128x128xbf16, #tpu.memory_space<vmem>>, %arg6: memref<128x128xf32, #tpu.memory_space<vmem>>) attributes {dimension_semantics = [#tpu.dimension_semantics<parallel>, #tpu.dimension_semantics<parallel>, #tpu.dimension_semantics<arbitrary>], iteration_bounds = array<i64: 1, 1, 1>, scalar_prefetch = 0 : i64, scratch_operands = 1 : i64, tpu.core_type = #tpu.core_type<tc>, window_params = [{transform_indices = @transform_0, window_bounds = array<i64: 128, 128>}, {transform_indices = @transform_1, window_bounds = array<i64: 128, 128>}, {transform_indices = @transform_2, window_bounds = array<i64: 128, 128>}]} {
    %c0_i32 = arith.constant 0 : i32
    %0 = arith.cmpi eq, %arg2, %c0_i32 : i32
    %1 = arith.extui %0 : i1 to i32
    %c0_i32_0 = arith.constant 0 : i32
    %2 = arith.cmpi ne, %1, %c0_i32_0 : i32
    scf.if %2 {
      %cst_10 = arith.constant 0.000000e+00 : f32
      %12 = vector.broadcast %cst_10 : f32 to vector<128x128xf32>
      %c0_11 = arith.constant 0 : index
      %c0_12 = arith.constant 0 : index
      %13 = vector.load %arg6[%c0_11, %c0_12] : memref<128x128xf32, #tpu.memory_space<vmem>>, vector<128x128xf32>
      tpu.vector_store %arg6[%c0_11, %c0_12], %12 {strides = array<i32>} : memref<128x128xf32, #tpu.memory_space<vmem>>, vector<128x128xf32>,
    } else {
    }
    %c0 = arith.constant 0 : index
    %c0_1 = arith.constant 0 : index
    %3 = vector.load %arg6[%c0, %c0_1] : memref<128x128xf32, #tpu.memory_space<vmem>>, vector<128x128xf32>
    %c0_2 = arith.constant 0 : index
    %c0_3 = arith.constant 0 : index
    %4 = vector.load %arg3[%c0_2, %c0_3] : memref<128x128xbf16, #tpu.memory_space<vmem>>, vector<128x128xbf16>
    %c0_4 = arith.constant 0 : index
    %c0_5 = arith.constant 0 : index
    %5 = vector.load %arg4[%c0_4, %c0_5] : memref<128x128xbf16, #tpu.memory_space<vmem>>, vector<128x128xbf16>
    %cst = arith.constant dense<0.000000e+00> : vector<128x128xf32>
    %6 = tpu.matmul %4, %5, %cst {dimension_numbers = #tpu.dot_dimension_numbers<[1], [0], [0], [1], [0, 0, 1, 1], [], []>} : vector<128x128xbf16>, vector<128x128xbf16>, vector<128x128xf32> -> vector<128x128xf32>
    %7 = arith.addf %3, %6 : vector<128x128xf32>
    %c0_6 = arith.constant 0 : index
    %c0_7 = arith.constant 0 : index
    %8 = vector.load %arg6[%c0_6, %c0_7] : memref<128x128xf32, #tpu.memory_space<vmem>>, vector<128x128xf32>
    tpu.vector_store %arg6[%c0_6, %c0_7], %7 {strides = array<i32>} : memref<128x128xf32, #tpu.memory_space<vmem>>, vector<128x128xf32>,
    %c0_i32_8 = arith.constant 0 : i32
    %9 = arith.cmpi eq, %arg2, %c0_i32_8 : i32
    %10 = arith.extui %9 : i1 to i32
    %c0_i32_9 = arith.constant 0 : i32
    %11 = arith.cmpi ne, %10, %c0_i32_9 : i32
    scf.if %11 {
      %c0_10 = arith.constant 0 : index
      %c0_11 = arith.constant 0 : index
      %12 = vector.load %arg6[%c0_10, %c0_11] : memref<128x128xf32, #tpu.memory_space<vmem>>, vector<128x128xf32>
      %cst_12 = arith.constant 0.000000e+00 : f32
      %13 = vector.broadcast %cst_12 : f32 to vector<128x128xf32>
      %14 = arith.cmpf ogt, %12, %13 : vector<128x128xf32>
      %cst_13 = arith.constant 2.000000e-01 : f32
      %15 = vector.broadcast %cst_13 : f32 to vector<128x128xf32>
      %16 = arith.mulf %15, %12 : vector<128x128xf32>
      %17 = arith.select %14, %12, %16 : vector<128x128xi1>, vector<128x128xf32>
      %18 = arith.truncf %17 : vector<128x128xf32> to vector<128x128xbf16>
      %c0_14 = arith.constant 0 : index
      %c0_15 = arith.constant 0 : index
      %19 = vector.load %arg5[%c0_14, %c0_15] : memref<128x128xbf16, #tpu.memory_space<vmem>>, vector<128x128xbf16>
      tpu.vector_store %arg5[%c0_14, %c0_15], %18 {strides = array<i32>} : memref<128x128xbf16, #tpu.memory_space<vmem>>, vector<128x128xbf16>,
    } else {
    }
    return
  }
  func.func @transform_0(%arg0: i32, %arg1: i32, %arg2: i32) -> (i32, i32) {
    %c0_i32 = arith.constant 0 : i32
    return %arg0, %arg2 : i32, i32
  }
  func.func @transform_1(%arg0: i32, %arg1: i32, %arg2: i32) -> (i32, i32) {
    %c0_i32 = arith.constant 0 : i32
    return %arg2, %arg1 : i32, i32
  }
  func.func @transform_2(%arg0: i32, %arg1: i32, %arg2: i32) -> (i32, i32) {
    %c0_i32 = arith.constant 0 : i32
    return %arg0, %arg1 : i32, i32
  }
}

module attributes {stable_mosaic.version = 11 : i64} {
  func.func @_mm_kernel(%arg0: i32, %arg1: i32, %arg2: i32, %arg3: memref<32x128xbf16, #tpu.memory_space<vmem>>, %arg4: memref<128x128xbf16, #tpu.memory_space<vmem>>, %arg5: memref<32x128xbf16, #tpu.memory_space<vmem>>, %arg6: memref<32x128xf32, #tpu.memory_space<vmem>>) attributes {dimension_semantics = [#tpu.dimension_semantics<parallel>, #tpu.dimension_semantics<parallel>, #tpu.dimension_semantics<arbitrary>], iteration_bounds = array<i64: 1, 1, 1>, scalar_prefetch = 0 : i64, scratch_operands = 1 : i64, tpu.core_type = #tpu.core_type<tc>, window_params = [{transform_indices = @transform_0, window_bounds = array<i64: 32, 128>}, {transform_indices = @transform_1, window_bounds = array<i64: 128, 128>}, {transform_indices = @transform_2, window_bounds = array<i64: 32, 128>}]} {
    %c0_i32 = arith.constant 0 : i32
    %0 = arith.cmpi eq, %arg2, %c0_i32 : i32
    %1 = arith.extui %0 : i1 to i32
    %c0_i32_0 = arith.constant 0 : i32
    %2 = arith.cmpi ne, %1, %c0_i32_0 : i32
    scf.if %2 {
      %cst_10 = arith.constant 0.000000e+00 : f32
      %12 = vector.broadcast %cst_10 : f32 to vector<32x128xf32>
      %c0_11 = arith.constant 0 : index
      %c0_12 = arith.constant 0 : index
      %13 = vector.load %arg6[%c0_11, %c0_12] : memref<32x128xf32, #tpu.memory_space<vmem>>, vector<32x128xf32>
      tpu.vector_store %arg6[%c0_11, %c0_12], %12 {strides = array<i32>} : memref<32x128xf32, #tpu.memory_space<vmem>>, vector<32x128xf32>,
    } else {
    }
    %c0 = arith.constant 0 : index
    %c0_1 = arith.constant 0 : index
    %3 = vector.load %arg6[%c0, %c0_1] : memref<32x128xf32, #tpu.memory_space<vmem>>, vector<32x128xf32>
    %c0_2 = arith.constant 0 : index
    %c0_3 = arith.constant 0 : index
    %4 = vector.load %arg3[%c0_2, %c0_3] : memref<32x128xbf16, #tpu.memory_space<vmem>>, vector<32x128xbf16>
    %c0_4 = arith.constant 0 : index
    %c0_5 = arith.constant 0 : index
    %5 = vector.load %arg4[%c0_4, %c0_5] : memref<128x128xbf16, #tpu.memory_space<vmem>>, vector<128x128xbf16>
    %cst = arith.constant dense<0.000000e+00> : vector<32x128xf32>
    %6 = tpu.matmul %4, %5, %cst {dimension_numbers = #tpu.dot_dimension_numbers<[1], [0], [0], [1], [0, 0, 1, 1], [], []>} : vector<32x128xbf16>, vector<128x128xbf16>, vector<32x128xf32> -> vector<32x128xf32>
    %7 = arith.addf %3, %6 : vector<32x128xf32>
    %c0_6 = arith.constant 0 : index
    %c0_7 = arith.constant 0 : index
    %8 = vector.load %arg6[%c0_6, %c0_7] : memref<32x128xf32, #tpu.memory_space<vmem>>, vector<32x128xf32>
    tpu.vector_store %arg6[%c0_6, %c0_7], %7 {strides = array<i32>} : memref<32x128xf32, #tpu.memory_space<vmem>>, vector<32x128xf32>,
    %c0_i32_8 = arith.constant 0 : i32
    %9 = arith.cmpi eq, %arg2, %c0_i32_8 : i32
    %10 = arith.extui %9 : i1 to i32
    %c0_i32_9 = arith.constant 0 : i32
    %11 = arith.cmpi ne, %10, %c0_i32_9 : i32
    scf.if %11 {
      %c0_10 = arith.constant 0 : index
      %c0_11 = arith.constant 0 : index
      %12 = vector.load %arg6[%c0_10, %c0_11] : memref<32x128xf32, #tpu.memory_space<vmem>>, vector<32x128xf32>
      %cst_12 = arith.constant dense<0.000000e+00> : vector<128xf32>
      %13 = vector.multi_reduction <add>, %12, %cst_12 [0] : vector<32x128xf32> to vector<128xf32>
      %14 = vector.shape_cast %13 : vector<128xf32> to vector<1x128xf32>
      %15 = arith.mulf %12, %12 : vector<32x128xf32>
      %cst_13 = arith.constant dense<0.000000e+00> : vector<128xf32>
      %16 = vector.multi_reduction <add>, %15, %cst_13 [0] : vector<32x128xf32> to vector<128xf32>
      %17 = vector.shape_cast %16 : vector<128xf32> to vector<1x128xf32>
      %cst_14 = arith.constant 3.125000e-02 : f32
      %18 = vector.broadcast %cst_14 : f32 to vector<1x128xf32>
      %19 = arith.mulf %14, %18 : vector<1x128xf32>
      %cst_15 = arith.constant 3.125000e-02 : f32
      %20 = vector.broadcast %cst_15 : f32 to vector<1x128xf32>
      %21 = arith.mulf %17, %20 : vector<1x128xf32>
      %22 = arith.mulf %19, %19 : vector<1x128xf32>
      %23 = arith.subf %21, %22 : vector<1x128xf32>
      %cst_16 = arith.constant 0.000000e+00 : f32
      %24 = vector.broadcast %cst_16 : f32 to vector<1x128xf32>
      %25 = arith.maximumf %23, %24 : vector<1x128xf32>
      %26 = vector.broadcast %19 : vector<1x128xf32> to vector<32x128xf32>
      %27 = arith.subf %12, %26 : vector<32x128xf32>
      %cst_17 = arith.constant 9.99999974E-6 : f32
      %28 = vector.broadcast %cst_17 : f32 to vector<1x128xf32>
      %29 = arith.addf %25, %28 : vector<1x128xf32>
      %30 = math.rsqrt %29 : vector<1x128xf32>
      %31 = vector.broadcast %30 : vector<1x128xf32> to vector<32x128xf32>
      %32 = arith.mulf %27, %31 : vector<32x128xf32>
      %cst_18 = arith.constant 0.000000e+00 : f32
      %33 = vector.broadcast %cst_18 : f32 to vector<32x128xf32>
      %34 = arith.cmpf ogt, %32, %33 : vector<32x128xf32>
      %cst_19 = arith.constant 2.000000e-01 : f32
      %35 = vector.broadcast %cst_19 : f32 to vector<32x128xf32>
      %36 = arith.mulf %35, %32 : vector<32x128xf32>
      %37 = arith.select %34, %32, %36 : vector<32x128xi1>, vector<32x128xf32>
      %38 = arith.truncf %37 : vector<32x128xf32> to vector<32x128xbf16>
      %c0_20 = arith.constant 0 : index
      %c0_21 = arith.constant 0 : index
      %39 = vector.load %arg5[%c0_20, %c0_21] : memref<32x128xbf16, #tpu.memory_space<vmem>>, vector<32x128xbf16>
      tpu.vector_store %arg5[%c0_20, %c0_21], %38 {strides = array<i32>} : memref<32x128xbf16, #tpu.memory_space<vmem>>, vector<32x128xbf16>,
    } else {
    }
    return
  }
  func.func @transform_0(%arg0: i32, %arg1: i32, %arg2: i32) -> (i32, i32) {
    %c0_i32 = arith.constant 0 : i32
    return %arg0, %arg2 : i32, i32
  }
  func.func @transform_1(%arg0: i32, %arg1: i32, %arg2: i32) -> (i32, i32) {
    %c0_i32 = arith.constant 0 : i32
    return %arg2, %arg1 : i32, i32
  }
  func.func @transform_2(%arg0: i32, %arg1: i32, %arg2: i32) -> (i32, i32) {
    %c0_i32 = arith.constant 0 : i32
    return %arg0, %arg1 : i32, i32
  }
}

module attributes {stable_mosaic.version = 11 : i64} {
  func.func @_mm_kernel(%arg0: i32, %arg1: i32, %arg2: i32, %arg3: memref<8x256xbf16, #tpu.memory_space<vmem>>, %arg4: memref<256x128xbf16, #tpu.memory_space<vmem>>, %arg5: memref<8x128xf32, #tpu.memory_space<vmem>>, %arg6: memref<8x128xf32, #tpu.memory_space<vmem>>) attributes {dimension_semantics = [#tpu.dimension_semantics<parallel>, #tpu.dimension_semantics<parallel>, #tpu.dimension_semantics<arbitrary>], iteration_bounds = array<i64: 1, 1, 1>, scalar_prefetch = 0 : i64, scratch_operands = 1 : i64, tpu.core_type = #tpu.core_type<tc>, window_params = [{transform_indices = @transform_0, window_bounds = array<i64: 8, 256>}, {transform_indices = @transform_1, window_bounds = array<i64: 256, 128>}, {transform_indices = @transform_2, window_bounds = array<i64: 8, 128>}]} {
    %c0_i32 = arith.constant 0 : i32
    %0 = arith.cmpi eq, %arg2, %c0_i32 : i32
    %1 = arith.extui %0 : i1 to i32
    %c0_i32_0 = arith.constant 0 : i32
    %2 = arith.cmpi ne, %1, %c0_i32_0 : i32
    scf.if %2 {
      %cst_10 = arith.constant 0.000000e+00 : f32
      %12 = vector.broadcast %cst_10 : f32 to vector<8x128xf32>
      %c0_11 = arith.constant 0 : index
      %c0_12 = arith.constant 0 : index
      %13 = vector.load %arg6[%c0_11, %c0_12] : memref<8x128xf32, #tpu.memory_space<vmem>>, vector<8x128xf32>
      tpu.vector_store %arg6[%c0_11, %c0_12], %12 {strides = array<i32>} : memref<8x128xf32, #tpu.memory_space<vmem>>, vector<8x128xf32>,
    } else {
    }
    %c0 = arith.constant 0 : index
    %c0_1 = arith.constant 0 : index
    %3 = vector.load %arg6[%c0, %c0_1] : memref<8x128xf32, #tpu.memory_space<vmem>>, vector<8x128xf32>
    %c0_2 = arith.constant 0 : index
    %c0_3 = arith.constant 0 : index
    %4 = vector.load %arg3[%c0_2, %c0_3] : memref<8x256xbf16, #tpu.memory_space<vmem>>, vector<8x256xbf16>
    %c0_4 = arith.constant 0 : index
    %c0_5 = arith.constant 0 : index
    %5 = vector.load %arg4[%c0_4, %c0_5] : memref<256x128xbf16, #tpu.memory_space<vmem>>, vector<256x128xbf16>
    %cst = arith.constant dense<0.000000e+00> : vector<8x128xf32>
    %6 = tpu.matmul %4, %5, %cst {dimension_numbers = #tpu.dot_dimension_numbers<[1], [0], [0], [1], [0, 0, 1, 1], [], []>} : vector<8x256xbf16>, vector<256x128xbf16>, vector<8x128xf32> -> vector<8x128xf32>
    %7 = arith.addf %3, %6 : vector<8x128xf32>
    %c0_6 = arith.constant 0 : index
    %c0_7 = arith.constant 0 : index
    %8 = vector.load %arg6[%c0_6, %c0_7] : memref<8x128xf32, #tpu.memory_space<vmem>>, vector<8x128xf32>
    tpu.vector_store %arg6[%c0_6, %c0_7], %7 {strides = array<i32>} : memref<8x128xf32, #tpu.memory_space<vmem>>, vector<8x128xf32>,
    %c0_i32_8 = arith.constant 0 : i32
    %9 = arith.cmpi eq, %arg2, %c0_i32_8 : i32
    %10 = arith.extui %9 : i1 to i32
    %c0_i32_9 = arith.constant 0 : i32
    %11 = arith.cmpi ne, %10, %c0_i32_9 : i32
    scf.if %11 {
      %c0_10 = arith.constant 0 : index
      %c0_11 = arith.constant 0 : index
      %12 = vector.load %arg6[%c0_10, %c0_11] : memref<8x128xf32, #tpu.memory_space<vmem>>, vector<8x128xf32>
      %c0_12 = arith.constant 0 : index
      %c0_13 = arith.constant 0 : index
      %13 = vector.load %arg5[%c0_12, %c0_13] : memref<8x128xf32, #tpu.memory_space<vmem>>, vector<8x128xf32>
      tpu.vector_store %arg5[%c0_12, %c0_13], %12 {strides = array<i32>} : memref<8x128xf32, #tpu.memory_space<vmem>>, vector<8x128xf32>,
    } else {
    }
    return
  }
  func.func @transform_0(%arg0: i32, %arg1: i32, %arg2: i32) -> (i32, i32) {
    %c0_i32 = arith.constant 0 : i32
    return %arg0, %arg2 : i32, i32
  }
  func.func @transform_1(%arg0: i32, %arg1: i32, %arg2: i32) -> (i32, i32) {
    %c0_i32 = arith.constant 0 : i32
    return %arg2, %arg1 : i32, i32
  }
  func.func @transform_2(%arg0: i32, %arg1: i32, %arg2: i32) -> (i32, i32) {
    %c0_i32 = arith.constant 0 : i32
    return %arg0, %arg1 : i32, i32
  }
}

module attributes {stable_mosaic.version = 11 : i64} {
  func.func @_mm_kernel(%arg0: i32, %arg1: i32, %arg2: i32, %arg3: memref<32x128xbf16, #tpu.memory_space<vmem>>, %arg4: memref<128x128xbf16, #tpu.memory_space<vmem>>, %arg5: memref<32x128xbf16, #tpu.memory_space<vmem>>, %arg6: memref<32x128xf32, #tpu.memory_space<vmem>>) attributes {dimension_semantics = [#tpu.dimension_semantics<parallel>, #tpu.dimension_semantics<parallel>, #tpu.dimension_semantics<arbitrary>], iteration_bounds = array<i64: 1, 1, 1>, scalar_prefetch = 0 : i64, scratch_operands = 1 : i64, tpu.core_type = #tpu.core_type<tc>, window_params = [{transform_indices = @transform_0, window_bounds = array<i64: 32, 128>}, {transform_indices = @transform_1, window_bounds = array<i64: 128, 128>}, {transform_indices = @transform_2, window_bounds = array<i64: 32, 128>}]} {
    %c0_i32 = arith.constant 0 : i32
    %0 = arith.cmpi eq, %arg2, %c0_i32 : i32
    %1 = arith.extui %0 : i1 to i32
    %c0_i32_0 = arith.constant 0 : i32
    %2 = arith.cmpi ne, %1, %c0_i32_0 : i32
    scf.if %2 {
      %cst_10 = arith.constant 0.000000e+00 : f32
      %12 = vector.broadcast %cst_10 : f32 to vector<32x128xf32>
      %c0_11 = arith.constant 0 : index
      %c0_12 = arith.constant 0 : index
      %13 = vector.load %arg6[%c0_11, %c0_12] : memref<32x128xf32, #tpu.memory_space<vmem>>, vector<32x128xf32>
      tpu.vector_store %arg6[%c0_11, %c0_12], %12 {strides = array<i32>} : memref<32x128xf32, #tpu.memory_space<vmem>>, vector<32x128xf32>,
    } else {
    }
    %c0 = arith.constant 0 : index
    %c0_1 = arith.constant 0 : index
    %3 = vector.load %arg6[%c0, %c0_1] : memref<32x128xf32, #tpu.memory_space<vmem>>, vector<32x128xf32>
    %c0_2 = arith.constant 0 : index
    %c0_3 = arith.constant 0 : index
    %4 = vector.load %arg3[%c0_2, %c0_3] : memref<32x128xbf16, #tpu.memory_space<vmem>>, vector<32x128xbf16>
    %c0_4 = arith.constant 0 : index
    %c0_5 = arith.constant 0 : index
    %5 = vector.load %arg4[%c0_4, %c0_5] : memref<128x128xbf16, #tpu.memory_space<vmem>>, vector<128x128xbf16>
    %cst = arith.constant dense<0.000000e+00> : vector<32x128xf32>
    %6 = tpu.matmul %4, %5, %cst {dimension_numbers = #tpu.dot_dimension_numbers<[1], [0], [0], [1], [0, 0, 1, 1], [], []>} : vector<32x128xbf16>, vector<128x128xbf16>, vector<32x128xf32> -> vector<32x128xf32>
    %7 = arith.addf %3, %6 : vector<32x128xf32>
    %c0_6 = arith.constant 0 : index
    %c0_7 = arith.constant 0 : index
    %8 = vector.load %arg6[%c0_6, %c0_7] : memref<32x128xf32, #tpu.memory_space<vmem>>, vector<32x128xf32>
    tpu.vector_store %arg6[%c0_6, %c0_7], %7 {strides = array<i32>} : memref<32x128xf32, #tpu.memory_space<vmem>>, vector<32x128xf32>,
    %c0_i32_8 = arith.constant 0 : i32
    %9 = arith.cmpi eq, %arg2, %c0_i32_8 : i32
    %10 = arith.extui %9 : i1 to i32
    %c0_i32_9 = arith.constant 0 : i32
    %11 = arith.cmpi ne, %10, %c0_i32_9 : i32
    scf.if %11 {
      %c0_10 = arith.constant 0 : index
      %c0_11 = arith.constant 0 : index
      %12 = vector.load %arg6[%c0_10, %c0_11] : memref<32x128xf32, #tpu.memory_space<vmem>>, vector<32x128xf32>
      %cst_12 = arith.constant dense<0.000000e+00> : vector<128xf32>
      %13 = vector.multi_reduction <add>, %12, %cst_12 [0] : vector<32x128xf32> to vector<128xf32>
      %14 = vector.shape_cast %13 : vector<128xf32> to vector<1x128xf32>
      %15 = arith.mulf %12, %12 : vector<32x128xf32>
      %cst_13 = arith.constant dense<0.000000e+00> : vector<128xf32>
      %16 = vector.multi_reduction <add>, %15, %cst_13 [0] : vector<32x128xf32> to vector<128xf32>
      %17 = vector.shape_cast %16 : vector<128xf32> to vector<1x128xf32>
      %cst_14 = arith.constant 3.125000e-02 : f32
      %18 = vector.broadcast %cst_14 : f32 to vector<1x128xf32>
      %19 = arith.mulf %14, %18 : vector<1x128xf32>
      %cst_15 = arith.constant 3.125000e-02 : f32
      %20 = vector.broadcast %cst_15 : f32 to vector<1x128xf32>
      %21 = arith.mulf %17, %20 : vector<1x128xf32>
      %22 = arith.mulf %19, %19 : vector<1x128xf32>
      %23 = arith.subf %21, %22 : vector<1x128xf32>
      %cst_16 = arith.constant 0.000000e+00 : f32
      %24 = vector.broadcast %cst_16 : f32 to vector<1x128xf32>
      %25 = arith.maximumf %23, %24 : vector<1x128xf32>
      %26 = vector.broadcast %19 : vector<1x128xf32> to vector<32x128xf32>
      %27 = arith.subf %12, %26 : vector<32x128xf32>
      %cst_17 = arith.constant 9.99999974E-6 : f32
      %28 = vector.broadcast %cst_17 : f32 to vector<1x128xf32>
      %29 = arith.addf %25, %28 : vector<1x128xf32>
      %30 = math.rsqrt %29 : vector<1x128xf32>
      %31 = vector.broadcast %30 : vector<1x128xf32> to vector<32x128xf32>
      %32 = arith.mulf %27, %31 : vector<32x128xf32>
      %cst_18 = arith.constant 0.000000e+00 : f32
      %33 = vector.broadcast %cst_18 : f32 to vector<32x128xf32>
      %34 = arith.maximumf %32, %33 : vector<32x128xf32>
      %35 = arith.truncf %34 : vector<32x128xf32> to vector<32x128xbf16>
      %c0_19 = arith.constant 0 : index
      %c0_20 = arith.constant 0 : index
      %36 = vector.load %arg5[%c0_19, %c0_20] : memref<32x128xbf16, #tpu.memory_space<vmem>>, vector<32x128xbf16>
      tpu.vector_store %arg5[%c0_19, %c0_20], %35 {strides = array<i32>} : memref<32x128xbf16, #tpu.memory_space<vmem>>, vector<32x128xbf16>,
    } else {
    }
    return
  }
  func.func @transform_0(%arg0: i32, %arg1: i32, %arg2: i32) -> (i32, i32) {
    %c0_i32 = arith.constant 0 : i32
    return %arg0, %arg2 : i32, i32
  }
  func.func @transform_1(%arg0: i32, %arg1: i32, %arg2: i32) -> (i32, i32) {
    %c0_i32 = arith.constant 0 : i32
    return %arg2, %arg1 : i32, i32
  }
  func.func @transform_2(%arg0: i32, %arg1: i32, %arg2: i32) -> (i32, i32) {
    %c0_i32 = arith.constant 0 : i32
    return %arg0, %arg1 : i32, i32
  }
}

module attributes {stable_mosaic.version = 11 : i64} {
  func.func @_mm_kernel(%arg0: i32, %arg1: i32, %arg2: i32, %arg3: memref<32x256xbf16, #tpu.memory_space<vmem>>, %arg4: memref<256x128xbf16, #tpu.memory_space<vmem>>, %arg5: memref<32x128xbf16, #tpu.memory_space<vmem>>, %arg6: memref<32x128xf32, #tpu.memory_space<vmem>>) attributes {dimension_semantics = [#tpu.dimension_semantics<parallel>, #tpu.dimension_semantics<parallel>, #tpu.dimension_semantics<arbitrary>], iteration_bounds = array<i64: 1, 1, 1>, scalar_prefetch = 0 : i64, scratch_operands = 1 : i64, tpu.core_type = #tpu.core_type<tc>, window_params = [{transform_indices = @transform_0, window_bounds = array<i64: 32, 256>}, {transform_indices = @transform_1, window_bounds = array<i64: 256, 128>}, {transform_indices = @transform_2, window_bounds = array<i64: 32, 128>}]} {
    %c0_i32 = arith.constant 0 : i32
    %0 = arith.cmpi eq, %arg2, %c0_i32 : i32
    %1 = arith.extui %0 : i1 to i32
    %c0_i32_0 = arith.constant 0 : i32
    %2 = arith.cmpi ne, %1, %c0_i32_0 : i32
    scf.if %2 {
      %cst_10 = arith.constant 0.000000e+00 : f32
      %12 = vector.broadcast %cst_10 : f32 to vector<32x128xf32>
      %c0_11 = arith.constant 0 : index
      %c0_12 = arith.constant 0 : index
      %13 = vector.load %arg6[%c0_11, %c0_12] : memref<32x128xf32, #tpu.memory_space<vmem>>, vector<32x128xf32>
      tpu.vector_store %arg6[%c0_11, %c0_12], %12 {strides = array<i32>} : memref<32x128xf32, #tpu.memory_space<vmem>>, vector<32x128xf32>,
    } else {
    }
    %c0 = arith.constant 0 : index
    %c0_1 = arith.constant 0 : index
    %3 = vector.load %arg6[%c0, %c0_1] : memref<32x128xf32, #tpu.memory_space<vmem>>, vector<32x128xf32>
    %c0_2 = arith.constant 0 : index
    %c0_3 = arith.constant 0 : index
    %4 = vector.load %arg3[%c0_2, %c0_3] : memref<32x256xbf16, #tpu.memory_space<vmem>>, vector<32x256xbf16>
    %c0_4 = arith.constant 0 : index
    %c0_5 = arith.constant 0 : index
    %5 = vector.load %arg4[%c0_4, %c0_5] : memref<256x128xbf16, #tpu.memory_space<vmem>>, vector<256x128xbf16>
    %cst = arith.constant dense<0.000000e+00> : vector<32x128xf32>
    %6 = tpu.matmul %4, %5, %cst {dimension_numbers = #tpu.dot_dimension_numbers<[1], [0], [0], [1], [0, 0, 1, 1], [], []>} : vector<32x256xbf16>, vector<256x128xbf16>, vector<32x128xf32> -> vector<32x128xf32>
    %7 = arith.addf %3, %6 : vector<32x128xf32>
    %c0_6 = arith.constant 0 : index
    %c0_7 = arith.constant 0 : index
    %8 = vector.load %arg6[%c0_6, %c0_7] : memref<32x128xf32, #tpu.memory_space<vmem>>, vector<32x128xf32>
    tpu.vector_store %arg6[%c0_6, %c0_7], %7 {strides = array<i32>} : memref<32x128xf32, #tpu.memory_space<vmem>>, vector<32x128xf32>,
    %c0_i32_8 = arith.constant 0 : i32
    %9 = arith.cmpi eq, %arg2, %c0_i32_8 : i32
    %10 = arith.extui %9 : i1 to i32
    %c0_i32_9 = arith.constant 0 : i32
    %11 = arith.cmpi ne, %10, %c0_i32_9 : i32
    scf.if %11 {
      %c0_10 = arith.constant 0 : index
      %c0_11 = arith.constant 0 : index
      %12 = vector.load %arg6[%c0_10, %c0_11] : memref<32x128xf32, #tpu.memory_space<vmem>>, vector<32x128xf32>
      %cst_12 = arith.constant dense<0.000000e+00> : vector<128xf32>
      %13 = vector.multi_reduction <add>, %12, %cst_12 [0] : vector<32x128xf32> to vector<128xf32>
      %14 = vector.shape_cast %13 : vector<128xf32> to vector<1x128xf32>
      %15 = arith.mulf %12, %12 : vector<32x128xf32>
      %cst_13 = arith.constant dense<0.000000e+00> : vector<128xf32>
      %16 = vector.multi_reduction <add>, %15, %cst_13 [0] : vector<32x128xf32> to vector<128xf32>
      %17 = vector.shape_cast %16 : vector<128xf32> to vector<1x128xf32>
      %18 = vector.extract_strided_slice %14 {offsets = [0, 0], sizes = [1, 32], strides = [1, 1]} : vector<1x128xf32> to vector<1x32xf32>
      %19 = vector.extract_strided_slice %14 {offsets = [0, 32], sizes = [1, 32], strides = [1, 1]} : vector<1x128xf32> to vector<1x32xf32>
      %20 = arith.addf %18, %19 : vector<1x32xf32>
      %21 = vector.extract_strided_slice %14 {offsets = [0, 64], sizes = [1, 32], strides = [1, 1]} : vector<1x128xf32> to vector<1x32xf32>
      %22 = arith.addf %20, %21 : vector<1x32xf32>
      %23 = vector.extract_strided_slice %14 {offsets = [0, 96], sizes = [1, 32], strides = [1, 1]} : vector<1x128xf32> to vector<1x32xf32>
      %24 = arith.addf %22, %23 : vector<1x32xf32>
      %25 = tpu.concatenate %24, %24, %24, %24 in 1 : vector<1x32xf32>, vector<1x32xf32>, vector<1x32xf32>, vector<1x32xf32> -> vector<1x128xf32>
      %26 = vector.extract_strided_slice %17 {offsets = [0, 0], sizes = [1, 32], strides = [1, 1]} : vector<1x128xf32> to vector<1x32xf32>
      %27 = vector.extract_strided_slice %17 {offsets = [0, 32], sizes = [1, 32], strides = [1, 1]} : vector<1x128xf32> to vector<1x32xf32>
      %28 = arith.addf %26, %27 : vector<1x32xf32>
      %29 = vector.extract_strided_slice %17 {offsets = [0, 64], sizes = [1, 32], strides = [1, 1]} : vector<1x128xf32> to vector<1x32xf32>
      %30 = arith.addf %28, %29 : vector<1x32xf32>
      %31 = vector.extract_strided_slice %17 {offsets = [0, 96], sizes = [1, 32], strides = [1, 1]} : vector<1x128xf32> to vector<1x32xf32>
      %32 = arith.addf %30, %31 : vector<1x32xf32>
      %33 = tpu.concatenate %32, %32, %32, %32 in 1 : vector<1x32xf32>, vector<1x32xf32>, vector<1x32xf32>, vector<1x32xf32> -> vector<1x128xf32>
      %cst_14 = arith.constant 7.812500e-03 : f32
      %34 = vector.broadcast %cst_14 : f32 to vector<1x128xf32>
      %35 = arith.mulf %25, %34 : vector<1x128xf32>
      %cst_15 = arith.constant 7.812500e-03 : f32
      %36 = vector.broadcast %cst_15 : f32 to vector<1x128xf32>
      %37 = arith.mulf %33, %36 : vector<1x128xf32>
      %38 = arith.mulf %35, %35 : vector<1x128xf32>
      %39 = arith.subf %37, %38 : vector<1x128xf32>
      %cst_16 = arith.constant 0.000000e+00 : f32
      %40 = vector.broadcast %cst_16 : f32 to vector<1x128xf32>
      %41 = arith.maximumf %39, %40 : vector<1x128xf32>
      %42 = vector.broadcast %35 : vector<1x128xf32> to vector<32x128xf32>
      %43 = arith.subf %12, %42 : vector<32x128xf32>
      %cst_17 = arith.constant 9.99999974E-6 : f32
      %44 = vector.broadcast %cst_17 : f32 to vector<1x128xf32>
      %45 = arith.addf %41, %44 : vector<1x128xf32>
      %46 = math.rsqrt %45 : vector<1x128xf32>
      %47 = vector.broadcast %46 : vector<1x128xf32> to vector<32x128xf32>
      %48 = arith.mulf %43, %47 : vector<32x128xf32>
      %cst_18 = arith.constant 0.000000e+00 : f32
      %49 = vector.broadcast %cst_18 : f32 to vector<32x128xf32>
      %50 = arith.maximumf %48, %49 : vector<32x128xf32>
      %51 = arith.truncf %50 : vector<32x128xf32> to vector<32x128xbf16>
      %c0_19 = arith.constant 0 : index
      %c0_20 = arith.constant 0 : index
      %52 = vector.load %arg5[%c0_19, %c0_20] : memref<32x128xbf16, #tpu.memory_space<vmem>>, vector<32x128xbf16>
      tpu.vector_store %arg5[%c0_19, %c0_20], %51 {strides = array<i32>} : memref<32x128xbf16, #tpu.memory_space<vmem>>, vector<32x128xbf16>,
    } else {
    }
    return
  }
  func.func @transform_0(%arg0: i32, %arg1: i32, %arg2: i32) -> (i32, i32) {
    %c0_i32 = arith.constant 0 : i32
    return %arg0, %arg2 : i32, i32
  }
  func.func @transform_1(%arg0: i32, %arg1: i32, %arg2: i32) -> (i32, i32) {
    %c0_i32 = arith.constant 0 : i32
    return %arg2, %arg1 : i32, i32
  }
  func.func @transform_2(%arg0: i32, %arg1: i32, %arg2: i32) -> (i32, i32) {
    %c0_i32 = arith.constant 0 : i32
    return %arg0, %arg1 : i32, i32
  }
}

module attributes {stable_mosaic.version = 11 : i64} {
  func.func @_mm_kernel(%arg0: i32, %arg1: i32, %arg2: i32, %arg3: memref<128x128xbf16, #tpu.memory_space<vmem>>, %arg4: memref<128x128xbf16, #tpu.memory_space<vmem>>, %arg5: memref<128x128xf32, #tpu.memory_space<vmem>>, %arg6: memref<128x128xf32, #tpu.memory_space<vmem>>) attributes {dimension_semantics = [#tpu.dimension_semantics<parallel>, #tpu.dimension_semantics<parallel>, #tpu.dimension_semantics<arbitrary>], iteration_bounds = array<i64: 1, 1, 1>, scalar_prefetch = 0 : i64, scratch_operands = 1 : i64, tpu.core_type = #tpu.core_type<tc>, window_params = [{transform_indices = @transform_0, window_bounds = array<i64: 128, 128>}, {transform_indices = @transform_1, window_bounds = array<i64: 128, 128>}, {transform_indices = @transform_2, window_bounds = array<i64: 128, 128>}]} {
    %c0_i32 = arith.constant 0 : i32
    %0 = arith.cmpi eq, %arg2, %c0_i32 : i32
    %1 = arith.extui %0 : i1 to i32
    %c0_i32_0 = arith.constant 0 : i32
    %2 = arith.cmpi ne, %1, %c0_i32_0 : i32
    scf.if %2 {
      %cst_10 = arith.constant 0.000000e+00 : f32
      %12 = vector.broadcast %cst_10 : f32 to vector<128x128xf32>
      %c0_11 = arith.constant 0 : index
      %c0_12 = arith.constant 0 : index
      %13 = vector.load %arg6[%c0_11, %c0_12] : memref<128x128xf32, #tpu.memory_space<vmem>>, vector<128x128xf32>
      tpu.vector_store %arg6[%c0_11, %c0_12], %12 {strides = array<i32>} : memref<128x128xf32, #tpu.memory_space<vmem>>, vector<128x128xf32>,
    } else {
    }
    %c0 = arith.constant 0 : index
    %c0_1 = arith.constant 0 : index
    %3 = vector.load %arg6[%c0, %c0_1] : memref<128x128xf32, #tpu.memory_space<vmem>>, vector<128x128xf32>
    %c0_2 = arith.constant 0 : index
    %c0_3 = arith.constant 0 : index
    %4 = vector.load %arg3[%c0_2, %c0_3] : memref<128x128xbf16, #tpu.memory_space<vmem>>, vector<128x128xbf16>
    %c0_4 = arith.constant 0 : index
    %c0_5 = arith.constant 0 : index
    %5 = vector.load %arg4[%c0_4, %c0_5] : memref<128x128xbf16, #tpu.memory_space<vmem>>, vector<128x128xbf16>
    %cst = arith.constant dense<0.000000e+00> : vector<128x128xf32>
    %6 = tpu.matmul %4, %5, %cst {dimension_numbers = #tpu.dot_dimension_numbers<[1], [0], [0], [1], [0, 0, 1, 1], [], []>} : vector<128x128xbf16>, vector<128x128xbf16>, vector<128x128xf32> -> vector<128x128xf32>
    %7 = arith.addf %3, %6 : vector<128x128xf32>
    %c0_6 = arith.constant 0 : index
    %c0_7 = arith.constant 0 : index
    %8 = vector.load %arg6[%c0_6, %c0_7] : memref<128x128xf32, #tpu.memory_space<vmem>>, vector<128x128xf32>
    tpu.vector_store %arg6[%c0_6, %c0_7], %7 {strides = array<i32>} : memref<128x128xf32, #tpu.memory_space<vmem>>, vector<128x128xf32>,
    %c0_i32_8 = arith.constant 0 : i32
    %9 = arith.cmpi eq, %arg2, %c0_i32_8 : i32
    %10 = arith.extui %9 : i1 to i32
    %c0_i32_9 = arith.constant 0 : i32
    %11 = arith.cmpi ne, %10, %c0_i32_9 : i32
    scf.if %11 {
      %c0_10 = arith.constant 0 : index
      %c0_11 = arith.constant 0 : index
      %12 = vector.load %arg6[%c0_10, %c0_11] : memref<128x128xf32, #tpu.memory_space<vmem>>, vector<128x128xf32>
      %13 = math.tanh %12 : vector<128x128xf32>
      %c0_12 = arith.constant 0 : index
      %c0_13 = arith.constant 0 : index
      %14 = vector.load %arg5[%c0_12, %c0_13] : memref<128x128xf32, #tpu.memory_space<vmem>>, vector<128x128xf32>
      tpu.vector_store %arg5[%c0_12, %c0_13], %13 {strides = array<i32>} : memref<128x128xf32, #tpu.memory_space<vmem>>, vector<128x128xf32>,
    } else {
    }
    return
  }
  func.func @transform_0(%arg0: i32, %arg1: i32, %arg2: i32) -> (i32, i32) {
    %c0_i32 = arith.constant 0 : i32
    return %arg0, %arg2 : i32, i32
  }
  func.func @transform_1(%arg0: i32, %arg1: i32, %arg2: i32) -> (i32, i32) {
    %c0_i32 = arith.constant 0 : i32
    return %arg2, %arg1 : i32, i32
  }
  func.func @transform_2(%arg0: i32, %arg1: i32, %arg2: i32) -> (i32, i32) {
    %c0_i32 = arith.constant 0 : i32
    return %arg0, %arg1 : i32, i32
  }
}

</mosaic_0001>

<llo_original>
// kernel: fwd.9
$region0: #{fwd.9}
  #allocation0 [shape = 'u32[]', space=smem, size = 0x4, offset = 0x4, fixed_abs, tag = 'smem constant byte address 0x4 - core index']
  #allocation1 [shape = 'u32[144,128]{1,0:T(1,128)}', space=vmem, size = 0x12000, scoped, tag = 'internal scratch']
  #allocation2 [shape = 'f32[128,128]{1,0:T(8,128)}', space=vmem, size = 0x10000, scoped, tag = 'scratch operand']
  %s0 = inlined_call_operand.vmem [shape: bf16[128,128], index: 0, kind: input, shape index: {}]
  %s1 = inlined_call_operand.vmem [shape: bf16[128,128], index: 1, kind: input, shape index: {}]
  %s2 = inlined_call_operand.vmem [shape: bf16[128,128], index: 2, kind: output, shape index: {}]
  %s3 = sld [smem:[#allocation0]]
  $region26: #{fwd.9} parent=0
    _
  %s5 = ssub.s32 1, %s3
  %s6 = scalar_select 0, %s5, %s3
  // Predicated region
  $region2: #{fwd.9} parent=0 // pred_check
    _
  $region3: #{fwd.9} parent=0 // pred_check_branch
    %8 = sbr.rel (0) target = $region5
  $region4: #{fwd.9} parent=0 // pred_region
    _
  $region5: #{fwd.9} parent=0 // pred_fallthru
    _
  // Predicated region
  $region6: #{fwd.9} parent=0 // pred_check
    _
  $region7: #{fwd.9} parent=0 // pred_check_branch
    %10 = sbr.rel (0) target = $region9
  $region8: #{fwd.9} parent=0 // pred_region
    _
  $region9: #{fwd.9} parent=0 // pred_fallthru
    _
  %p12 = scmp.eq.s32.totalorder 0, 0
  // Predicated region
  $region10: #{fwd.9} parent=0 // pred_check
    %p13 = pneg %p12
  $region11: #{fwd.9} parent=0 // pred_check_branch
    %15 = sbr.rel (%p13) target = $region13
  $region12: #{fwd.9} parent=0 // pred_region
    %16 = vst [vmem:[#allocation2] sm:$0xff] 0.0
    %17 = vst [vmem:[#allocation2 + $0x8] sm:$0xff] 0.0
    %18 = vst [vmem:[#allocation2 + $0x10] sm:$0xff] 0.0
    %19 = vst [vmem:[#allocation2 + $0x18] sm:$0xff] 0.0
    %20 = vst [vmem:[#allocation2 + $0x20] sm:$0xff] 0.0
    %21 = vst [vmem:[#allocation2 + $0x28] sm:$0xff] 0.0
    %22 = vst [vmem:[#allocation2 + $0x30] sm:$0xff] 0.0
    %23 = vst [vmem:[#allocation2 + $0x38] sm:$0xff] 0.0
    %24 = vst [vmem:[#allocation2 + $0x40] sm:$0xff] 0.0
    %25 = vst [vmem:[#allocation2 + $0x48] sm:$0xff] 0.0
    %26 = vst [vmem:[#allocation2 + $0x50] sm:$0xff] 0.0
    %27 = vst [vmem:[#allocation2 + $0x58] sm:$0xff] 0.0
    %28 = vst [vmem:[#allocation2 + $0x60] sm:$0xff] 0.0
    %29 = vst [vmem:[#allocation2 + $0x68] sm:$0xff] 0.0
    %30 = vst [vmem:[#allocation2 + $0x70] sm:$0xff] 0.0
    %31 = vst [vmem:[#allocation2 + $0x78] sm:$0xff] 0.0
  $region13: #{fwd.9} parent=0 // pred_fallthru
    _
  %v32 = vld [vmem:[#allocation2] sm:$0xff]
  %v33 = vld [vmem:[#allocation2 + $0x8] sm:$0xff]
  %v34 = vld [vmem:[#allocation2 + $0x10] sm:$0xff]
  %v35 = vld [vmem:[#allocation2 + $0x18] sm:$0xff]
  %v36 = vld [vmem:[#allocation2 + $0x20] sm:$0xff]
  %v37 = vld [vmem:[#allocation2 + $0x28] sm:$0xff]
  %v38 = vld [vmem:[#allocation2 + $0x30] sm:$0xff]
  %v39 = vld [vmem:[#allocation2 + $0x38] sm:$0xff]
  %v40 = vld [vmem:[#allocation2 + $0x40] sm:$0xff]
  %v41 = vld [vmem:[#allocation2 + $0x48] sm:$0xff]
  %v42 = vld [vmem:[#allocation2 + $0x50] sm:$0xff]
  %v43 = vld [vmem:[#allocation2 + $0x58] sm:$0xff]
  %v44 = vld [vmem:[#allocation2 + $0x60] sm:$0xff]
  %v45 = vld [vmem:[#allocation2 + $0x68] sm:$0xff]
  %v46 = vld [vmem:[#allocation2 + $0x70] sm:$0xff]
  %v47 = vld [vmem:[#allocation2 + $0x78] sm:$0xff]
  %v48 = vld [vmem:[%s0] sm:$0xf]
  %v49 = vld [vmem:[%s0 + $0x4] sm:$0xf]
  %v50 = vld [vmem:[%s0 + $0x8] sm:$0xf]
  %v51 = vld [vmem:[%s0 + $0xc] sm:$0xf]
  %v52 = vld [vmem:[%s0 + $0x10] sm:$0xf]
  %v53 = vld [vmem:[%s0 + $0x14] sm:$0xf]
  %v54 = vld [vmem:[%s0 + $0x18] sm:$0xf]
  %v55 = vld [vmem:[%s0 + $0x1c] sm:$0xf]
  %v56 = vld [vmem:[%s0 + $0x20] sm:$0xf]
  %v57 = vld [vmem:[%s0 + $0x24] sm:$0xf]
  %v58 = vld [vmem:[%s0 + $0x28] sm:$0xf]
  %v59 = vld [vmem:[%s0 + $0x2c] sm:$0xf]
  %v60 = vld [vmem:[%s0 + $0x30] sm:$0xf]
  %v61 = vld [vmem:[%s0 + $0x34] sm:$0xf]
  %v62 = vld [vmem:[%s0 + $0x38] sm:$0xf]
  %v63 = vld [vmem:[%s0 + $0x3c] sm:$0xf]
  %v64 = vld [vmem:[%s1] sm:$0xf]
  %v65 = vld [vmem:[%s1 + $0x4] sm:$0xf]
  %v66 = vld [vmem:[%s1 + $0x8] sm:$0xf]
  %v67 = vld [vmem:[%s1 + $0xc] sm:$0xf]
  %v68 = vld [vmem:[%s1 + $0x10] sm:$0xf]
  %v69 = vld [vmem:[%s1 + $0x14] sm:$0xf]
  %v70 = vld [vmem:[%s1 + $0x18] sm:$0xf]
  %v71 = vld [vmem:[%s1 + $0x1c] sm:$0xf]
  %v72 = vld [vmem:[%s1 + $0x20] sm:$0xf]
  %v73 = vld [vmem:[%s1 + $0x24] sm:$0xf]
  %v74 = vld [vmem:[%s1 + $0x28] sm:$0xf]
  %v75 = vld [vmem:[%s1 + $0x2c] sm:$0xf]
  %v76 = vld [vmem:[%s1 + $0x30] sm:$0xf]
  %v77 = vld [vmem:[%s1 + $0x34] sm:$0xf]
  %v78 = vld [vmem:[%s1 + $0x38] sm:$0xf]
  %v79 = vld [vmem:[%s1 + $0x3c] sm:$0xf]
  %v96 = vunpack.c.l.b16 %v48
  %v97 = vunpack.c.l.b16 %v49
  %v98 = vunpack.c.l.b16 %v50
  %v99 = vunpack.c.l.b16 %v51
  %v100 = vunpack.c.l.b16 %v52
  %v101 = vunpack.c.l.b16 %v53
  %v102 = vunpack.c.l.b16 %v54
  %v103 = vunpack.c.l.b16 %v55
  %v104 = vunpack.c.l.b16 %v56
  %v105 = vunpack.c.l.b16 %v57
  %v106 = vunpack.c.l.b16 %v58
  %v107 = vunpack.c.l.b16 %v59
  %v108 = vunpack.c.l.b16 %v60
  %v109 = vunpack.c.l.b16 %v61
  %v110 = vunpack.c.l.b16 %v62
  %v111 = vunpack.c.l.b16 %v63
  %v112 = vpack.c.b16 %v97, %v96
  %v113 = vpack.c.b16 %v99, %v98
  %v114 = vpack.c.b16 %v101, %v100
  %v115 = vpack.c.b16 %v103, %v102
  %v116 = vpack.c.b16 %v105, %v104
  %v117 = vpack.c.b16 %v107, %v106
  %v118 = vpack.c.b16 %v109, %v108
  %v119 = vpack.c.b16 %v111, %v110
  %v144 = vunpack.c.l.b16 %v64
  %v145 = vunpack.c.l.b16 %v65
  %v146 = vunpack.c.l.b16 %v66
  %v147 = vunpack.c.l.b16 %v67
  %v148 = vunpack.c.l.b16 %v68
  %v149 = vunpack.c.l.b16 %v69
  %v150 = vunpack.c.l.b16 %v70
  %v151 = vunpack.c.l.b16 %v71
  %v152 = vunpack.c.l.b16 %v72
  %v153 = vunpack.c.l.b16 %v73
  %v154 = vunpack.c.l.b16 %v74
  %v155 = vunpack.c.l.b16 %v75
  %v156 = vunpack.c.l.b16 %v76
  %v157 = vunpack.c.l.b16 %v77
  %v158 = vunpack.c.l.b16 %v78
  %v159 = vunpack.c.l.b16 %v79
  %v160 = vpack.c.b16 %v145, %v144
  %v161 = vpack.c.b16 %v147, %v146
  %v162 = vpack.c.b16 %v149, %v148
  %v163 = vpack.c.b16 %v151, %v150
  %v164 = vpack.c.b16 %v153, %v152
  %v165 = vpack.c.b16 %v155, %v154
  %v166 = vpack.c.b16 %v157, %v156
  %v167 = vpack.c.b16 %v159, %v158
  %176 = vmatprep.subr.bf16.mxu0 0
  %177 = vmatpush1.bf16.msra.mxu0 %v160
  %178 = vmatprep.subr.bf16.mxu0 0
  %179 = vmatpush1.bf16.msra.mxu0 %v161
  %180 = vmatprep.subr.bf16.mxu0 0
  %181 = vmatpush1.bf16.msra.mxu0 %v162
  %182 = vmatprep.subr.bf16.mxu0 0
  %183 = vmatpush1.bf16.msra.mxu0 %v163
  %184 = vmatprep.subr.bf16.mxu0 0
  %185 = vmatpush1.bf16.msra.mxu0 %v164
  %186 = vmatprep.subr.bf16.mxu0 0
  %187 = vmatpush1.bf16.msra.mxu0 %v165
  %188 = vmatprep.subr.bf16.mxu0 0
  %189 = vmatpush1.bf16.msra.mxu0 %v166
  %190 = vmatprep.subr.bf16.mxu0 0
  %191 = vmatpush1.bf16.msra.mxu0 %v167
  %192 = vmatprep.subr.bf16.mxu0 0
  %193 = vmatpush1.bf16.msra.mxu0 0
  %194 = vmatprep.subr.bf16.mxu0 0
  %195 = vmatpush1.bf16.msra.mxu0 0
  %196 = vmatprep.subr.bf16.mxu0 0
  %197 = vmatpush1.bf16.msra.mxu0 0
  %198 = vmatprep.subr.bf16.mxu0 0
  %199 = vmatpush1.bf16.msra.mxu0 0
  %200 = vmatprep.subr.bf16.mxu0 0
  %201 = vmatpush1.bf16.msra.mxu0 0
  %202 = vmatprep.subr.bf16.mxu0 0
  %203 = vmatpush1.bf16.msra.mxu0 0
  %204 = vmatprep.subr.bf16.mxu0 0
  %205 = vmatpush1.bf16.msra.mxu0 0
  %206 = vmatprep.subr.bf16.mxu0 0
  %207 = vmatpush1.bf16.msra.mxu0 0
  %208 = vmatprep.mubr.bf16.mxu0 0
  %209 = vmatmul.mubr.bf16.gmra.mrb[0].mxu0 %v112
  %v210 = vpop.f32.mrb[0].mxu0
  %v211 = vadd.f32 0.0, %v210
  %v212 = vpop.f32.mrb[0].mxu0
  %v213 = vpop.f32.mrb[0].mxu0
  %v214 = vadd.f32 0.0, %v213
  %v215 = vpop.f32.mrb[0].mxu0
  %216 = vmatprep.mubr.bf16.mxu0 0
  %217 = vmatmul.mubr.bf16.gmra.mrb[0].mxu0 %v113
  %v218 = vpop.f32.mrb[0].mxu0
  %v219 = vadd.f32 0.0, %v218
  %v220 = vpop.f32.mrb[0].mxu0
  %v221 = vpop.f32.mrb[0].mxu0
  %v222 = vadd.f32 0.0, %v221
  %v223 = vpop.f32.mrb[0].mxu0
  %224 = vmatprep.mubr.bf16.mxu0 0
  %225 = vmatmul.mubr.bf16.gmra.mrb[0].mxu0 %v114
  %v226 = vpop.f32.mrb[0].mxu0
  %v227 = vadd.f32 0.0, %v226
  %v228 = vpop.f32.mrb[0].mxu0
  %v229 = vpop.f32.mrb[0].mxu0
  %v230 = vadd.f32 0.0, %v229
  %v231 = vpop.f32.mrb[0].mxu0
  %232 = vmatprep.mubr.bf16.mxu0 0
  %233 = vmatmul.mubr.bf16.gmra.mrb[0].mxu0 %v115
  %v234 = vpop.f32.mrb[0].mxu0
  %v235 = vadd.f32 0.0, %v234
  %v236 = vpop.f32.mrb[0].mxu0
  %v237 = vpop.f32.mrb[0].mxu0
  %v238 = vadd.f32 0.0, %v237
  %v239 = vpop.f32.mrb[0].mxu0
  %240 = vmatprep.mubr.bf16.mxu0 0
  %241 = vmatmul.mubr.bf16.gmra.mrb[0].mxu0 %v116
  %v242 = vpop.f32.mrb[0].mxu0
  %v243 = vadd.f32 0.0, %v242
  %v244 = vpop.f32.mrb[0].mxu0
  %v245 = vpop.f32.mrb[0].mxu0
  %v246 = vadd.f32 0.0, %v245
  %v247 = vpop.f32.mrb[0].mxu0
  %248 = vmatprep.mubr.bf16.mxu0 0
  %249 = vmatmul.mubr.bf16.gmra.mrb[0].mxu0 %v117
  %v250 = vpop.f32.mrb[0].mxu0
  %v251 = vadd.f32 0.0, %v250
  %v252 = vpop.f32.mrb[0].mxu0
  %v253 = vpop.f32.mrb[0].mxu0
  %v254 = vadd.f32 0.0, %v253
  %v255 = vpop.f32.mrb[0].mxu0
  %256 = vmatprep.mubr.bf16.mxu0 0
  %257 = vmatmul.mubr.bf16.gmra.mrb[0].mxu0 %v118
  %v258 = vpop.f32.mrb[0].mxu0
  %v259 = vadd.f32 0.0, %v258
  %v260 = vpop.f32.mrb[0].mxu0
  %v261 = vpop.f32.mrb[0].mxu0
  %v262 = vadd.f32 0.0, %v261
  %v263 = vpop.f32.mrb[0].mxu0
  %264 = vmatprep.mubr.bf16.mxu0 0
  %265 = vmatmul.mubr.bf16.gmra.mrb[0].mxu0 %v119
  %v266 = vpop.f32.mrb[0].mxu0
  %v267 = vadd.f32 0.0, %v266
  %v268 = vpop.f32.mrb[0].mxu0
  %v269 = vpop.f32.mrb[0].mxu0
  %v270 = vadd.f32 0.0, %v269
  %v271 = vpop.f32.mrb[0].mxu0
  %272 = vdwg.mxu0
  %v273 = vadd.f32 %v32, %v211
  %v274 = vadd.f32 %v33, %v214
  %v275 = vadd.f32 %v34, %v219
  %v276 = vadd.f32 %v35, %v222
  %v277 = vadd.f32 %v36, %v227
  %v278 = vadd.f32 %v37, %v230
  %v279 = vadd.f32 %v38, %v235
  %v280 = vadd.f32 %v39, %v238
  %v281 = vadd.f32 %v40, %v243
  %v282 = vadd.f32 %v41, %v246
  %v283 = vadd.f32 %v42, %v251
  %v284 = vadd.f32 %v43, %v254
  %v285 = vadd.f32 %v44, %v259
  %v286 = vadd.f32 %v45, %v262
  %v287 = vadd.f32 %v46, %v267
  %v288 = vadd.f32 %v47, %v270
  %289 = vst [vmem:[#allocation2] sm:$0xff] %v273
  %290 = vst [vmem:[#allocation2 + $0x8] sm:$0xff] %v274
  %291 = vst [vmem:[#allocation2 + $0x10] sm:$0xff] %v275
  %292 = vst [vmem:[#allocation2 + $0x18] sm:$0xff] %v276
  %293 = vst [vmem:[#allocation2 + $0x20] sm:$0xff] %v277
  %294 = vst [vmem:[#allocation2 + $0x28] sm:$0xff] %v278
  %295 = vst [vmem:[#allocation2 + $0x30] sm:$0xff] %v279
  %296 = vst [vmem:[#allocation2 + $0x38] sm:$0xff] %v280
  %297 = vst [vmem:[#allocation2 + $0x40] sm:$0xff] %v281
  %298 = vst [vmem:[#allocation2 + $0x48] sm:$0xff] %v282
  %299 = vst [vmem:[#allocation2 + $0x50] sm:$0xff] %v283
  %300 = vst [vmem:[#allocation2 + $0x58] sm:$0xff] %v284
  %301 = vst [vmem:[#allocation2 + $0x60] sm:$0xff] %v285
  %302 = vst [vmem:[#allocation2 + $0x68] sm:$0xff] %v286
  %303 = vst [vmem:[#allocation2 + $0x70] sm:$0xff] %v287
  %304 = vst [vmem:[#allocation2 + $0x78] sm:$0xff] %v288
  // Predicated region
  $region14: #{fwd.9} parent=0 // pred_check
    %p305 = pneg %p12
  $region15: #{fwd.9} parent=0 // pred_check_branch
    %307 = sbr.rel (%p305) target = $region17
  $region16: #{fwd.9} parent=0 // pred_region
    %v308 = vld [vmem:[#allocation2] sm:$0xff]
    %v309 = vld [vmem:[#allocation2 + $0x8] sm:$0xff]
    %v310 = vld [vmem:[#allocation2 + $0x10] sm:$0xff]
    %v311 = vld [vmem:[#allocation2 + $0x18] sm:$0xff]
    %v312 = vld [vmem:[#allocation2 + $0x20] sm:$0xff]
    %v313 = vld [vmem:[#allocation2 + $0x28] sm:$0xff]
    %v314 = vld [vmem:[#allocation2 + $0x30] sm:$0xff]
    %v315 = vld [vmem:[#allocation2 + $0x38] sm:$0xff]
    %v316 = vld [vmem:[#allocation2 + $0x40] sm:$0xff]
    %v317 = vld [vmem:[#allocation2 + $0x48] sm:$0xff]
    %v318 = vld [vmem:[#allocation2 + $0x50] sm:$0xff]
    %v319 = vld [vmem:[#allocation2 + $0x58] sm:$0xff]
    %v320 = vld [vmem:[#allocation2 + $0x60] sm:$0xff]
    %v321 = vld [vmem:[#allocation2 + $0x68] sm:$0xff]
    %v322 = vld [vmem:[#allocation2 + $0x70] sm:$0xff]
    %v323 = vld [vmem:[#allocation2 + $0x78] sm:$0xff]
    %vm324 = vcmp.gt.f32.partialorder %v308, 0.0
    %vm325 = vcmp.gt.f32.partialorder %v309, 0.0
    %vm326 = vcmp.gt.f32.partialorder %v310, 0.0
    %vm327 = vcmp.gt.f32.partialorder %v311, 0.0
    %vm328 = vcmp.gt.f32.partialorder %v312, 0.0
    %vm329 = vcmp.gt.f32.partialorder %v313, 0.0
    %vm330 = vcmp.gt.f32.partialorder %v314, 0.0
    %vm331 = vcmp.gt.f32.partialorder %v315, 0.0
    %vm332 = vcmp.gt.f32.partialorder %v316, 0.0
    %vm333 = vcmp.gt.f32.partialorder %v317, 0.0
    %vm334 = vcmp.gt.f32.partialorder %v318, 0.0
    %vm335 = vcmp.gt.f32.partialorder %v319, 0.0
    %vm336 = vcmp.gt.f32.partialorder %v320, 0.0
    %vm337 = vcmp.gt.f32.partialorder %v321, 0.0
    %vm338 = vcmp.gt.f32.partialorder %v322, 0.0
    %vm339 = vcmp.gt.f32.partialorder %v323, 0.0
    %v340 = vmul.f32 %v308, 0.2
    %v341 = vmul.f32 %v309, 0.2
    %v342 = vmul.f32 %v310, 0.2
    %v343 = vmul.f32 %v311, 0.2
    %v344 = vmul.f32 %v312, 0.2
    %v345 = vmul.f32 %v313, 0.2
    %v346 = vmul.f32 %v314, 0.2
    %v347 = vmul.f32 %v315, 0.2
    %v348 = vmul.f32 %v316, 0.2
    %v349 = vmul.f32 %v317, 0.2
    %v350 = vmul.f32 %v318, 0.2
    %v351 = vmul.f32 %v319, 0.2
    %v352 = vmul.f32 %v320, 0.2
    %v353 = vmul.f32 %v321, 0.2
    %v354 = vmul.f32 %v322, 0.2
    %v355 = vmul.f32 %v323, 0.2
    %v356 = vsel %vm324, %v308, %v340
    %v357 = vsel %vm325, %v309, %v341
    %v358 = vsel %vm326, %v310, %v342
    %v359 = vsel %vm327, %v311, %v343
    %v360 = vsel %vm328, %v312, %v344
    %v361 = vsel %vm329, %v313, %v345
    %v362 = vsel %vm330, %v314, %v346
    %v363 = vsel %vm331, %v315, %v347
    %v364 = vsel %vm332, %v316, %v348
    %v365 = vsel %vm333, %v317, %v349
    %v366 = vsel %vm334, %v318, %v350
    %v367 = vsel %vm335, %v319, %v351
    %v368 = vsel %vm336, %v320, %v352
    %v369 = vsel %vm337, %v321, %v353
    %v370 = vsel %vm338, %v322, %v354
    %v371 = vsel %vm339, %v323, %v355
    %v372 = vpack.c.bf16 %v357, %v356
    %v373 = vpack.c.bf16 %v359, %v358
    %v374 = vpack.c.bf16 %v361, %v360
    %v375 = vpack.c.bf16 %v363, %v362
    %v376 = vpack.c.bf16 %v365, %v364
    %v377 = vpack.c.bf16 %v367, %v366
    %v378 = vpack.c.bf16 %v369, %v368
    %v379 = vpack.c.bf16 %v371, %v370
    %v388 = vunpack.c.l.b16 %v372
    %v389 = vunpack.c.h.b16 %v372
    %v390 = vunpack.c.l.b16 %v373
    %v391 = vunpack.c.h.b16 %v373
    %v392 = vunpack.c.l.b16 %v374
    %v393 = vunpack.c.h.b16 %v374
    %v394 = vunpack.c.l.b16 %v375
    %v395 = vunpack.c.h.b16 %v375
    %v396 = vunpack.c.l.b16 %v376
    %v397 = vunpack.c.h.b16 %v376
    %v398 = vunpack.c.l.b16 %v377
    %v399 = vunpack.c.h.b16 %v377
    %v400 = vunpack.c.l.b16 %v378
    %v401 = vunpack.c.h.b16 %v378
    %v402 = vunpack.c.l.b16 %v379
    %v403 = vunpack.c.h.b16 %v379
    %v404 = vpack.c.b16 %v388, %v388
    %v405 = vpack.c.b16 %v389, %v389
    %v406 = vpack.c.b16 %v390, %v390
    %v407 = vpack.c.b16 %v391, %v391
    %v408 = vpack.c.b16 %v392, %v392
    %v409 = vpack.c.b16 %v393, %v393
    %v410 = vpack.c.b16 %v394, %v394
    %v411 = vpack.c.b16 %v395, %v395
    %v412 = vpack.c.b16 %v396, %v396
    %v413 = vpack.c.b16 %v397, %v397
    %v414 = vpack.c.b16 %v398, %v398
    %v415 = vpack.c.b16 %v399, %v399
    %v416 = vpack.c.b16 %v400, %v400
    %v417 = vpack.c.b16 %v401, %v401
    %v418 = vpack.c.b16 %v402, %v402
    %v419 = vpack.c.b16 %v403, %v403
    %436 = vst [vmem:[%s2] sm:$0xf] %v404
    %437 = vst [vmem:[%s2 + $0x4] sm:$0xf] %v405
    %438 = vst [vmem:[%s2 + $0x8] sm:$0xf] %v406
    %439 = vst [vmem:[%s2 + $0xc] sm:$0xf] %v407
    %440 = vst [vmem:[%s2 + $0x10] sm:$0xf] %v408
    %441 = vst [vmem:[%s2 + $0x14] sm:$0xf] %v409
    %442 = vst [vmem:[%s2 + $0x18] sm:$0xf] %v410
    %443 = vst [vmem:[%s2 + $0x1c] sm:$0xf] %v411
    %444 = vst [vmem:[%s2 + $0x20] sm:$0xf] %v412
    %445 = vst [vmem:[%s2 + $0x24] sm:$0xf] %v413
    %446 = vst [vmem:[%s2 + $0x28] sm:$0xf] %v414
    %447 = vst [vmem:[%s2 + $0x2c] sm:$0xf] %v415
    %448 = vst [vmem:[%s2 + $0x30] sm:$0xf] %v416
    %449 = vst [vmem:[%s2 + $0x34] sm:$0xf] %v417
    %450 = vst [vmem:[%s2 + $0x38] sm:$0xf] %v418
    %451 = vst [vmem:[%s2 + $0x3c] sm:$0xf] %v419
  $region17: #{fwd.9} parent=0 // pred_fallthru
    _
  // Predicated region
  $region18: #{fwd.9} parent=0 // pred_check
    _
  $region19: #{fwd.9} parent=0 // pred_check_branch
    %453 = sbr.rel (0) target = $region21
  $region20: #{fwd.9} parent=0 // pred_region
    _
  $region21: #{fwd.9} parent=0 // pred_fallthru
    _
  // Predicated region
  $region22: #{fwd.9} parent=0 // pred_check
    _
  $region23: #{fwd.9} parent=0 // pred_check_branch
    %455 = sbr.rel (0) target = $region25
  $region24: #{fwd.9} parent=0 // pred_region
    _
  $region25: #{fwd.9} parent=0 // pred_fallthru
    _

// kernel: fwd.10
$region0: #{fwd.10}
  #allocation0 [shape = 'u32[]', space=smem, size = 0x4, offset = 0x4, fixed_abs, tag = 'smem constant byte address 0x4 - core index']
  #allocation1 [shape = 'u32[144,128]{1,0:T(1,128)}', space=vmem, size = 0x12000, scoped, tag = 'internal scratch']
  #allocation2 [shape = 'f32[32,128]{1,0:T(8,128)}', space=vmem, size = 0x4000, scoped, tag = 'scratch operand']
  %s0 = inlined_call_operand.vmem [shape: bf16[32,128], index: 0, kind: input, shape index: {}]
  %s1 = inlined_call_operand.vmem [shape: bf16[128,128], index: 1, kind: input, shape index: {}]
  %s2 = inlined_call_operand.vmem [shape: bf16[32,128], index: 2, kind: output, shape index: {}]
  %s3 = sld [smem:[#allocation0]]
  $region26: #{fwd.10} parent=0
    _
  %s5 = ssub.s32 1, %s3
  %s6 = scalar_select 0, %s5, %s3
  // Predicated region
  $region2: #{fwd.10} parent=0 // pred_check
    _
  $region3: #{fwd.10} parent=0 // pred_check_branch
    %8 = sbr.rel (0) target = $region5
  $region4: #{fwd.10} parent=0 // pred_region
    _
  $region5: #{fwd.10} parent=0 // pred_fallthru
    _
  // Predicated region
  $region6: #{fwd.10} parent=0 // pred_check
    _
  $region7: #{fwd.10} parent=0 // pred_check_branch
    %10 = sbr.rel (0) target = $region9
  $region8: #{fwd.10} parent=0 // pred_region
    _
  $region9: #{fwd.10} parent=0 // pred_fallthru
    _
  %p12 = scmp.eq.s32.totalorder 0, 0
  // Predicated region
  $region10: #{fwd.10} parent=0 // pred_check
    %p13 = pneg %p12
  $region11: #{fwd.10} parent=0 // pred_check_branch
    %15 = sbr.rel (%p13) target = $region13
  $region12: #{fwd.10} parent=0 // pred_region
    %16 = vst [vmem:[#allocation2] sm:$0xff] 0.0
    %17 = vst [vmem:[#allocation2 + $0x8] sm:$0xff] 0.0
    %18 = vst [vmem:[#allocation2 + $0x10] sm:$0xff] 0.0
    %19 = vst [vmem:[#allocation2 + $0x18] sm:$0xff] 0.0
  $region13: #{fwd.10} parent=0 // pred_fallthru
    _
  %v20 = vld [vmem:[#allocation2] sm:$0xff]
  %v21 = vld [vmem:[#allocation2 + $0x8] sm:$0xff]
  %v22 = vld [vmem:[#allocation2 + $0x10] sm:$0xff]
  %v23 = vld [vmem:[#allocation2 + $0x18] sm:$0xff]
  %v24 = vld [vmem:[%s0] sm:$0xf]
  %v25 = vld [vmem:[%s0 + $0x4] sm:$0xf]
  %v26 = vld [vmem:[%s0 + $0x8] sm:$0xf]
  %v27 = vld [vmem:[%s0 + $0xc] sm:$0xf]
  %v28 = vld [vmem:[%s1] sm:$0xf]
  %v29 = vld [vmem:[%s1 + $0x4] sm:$0xf]
  %v30 = vld [vmem:[%s1 + $0x8] sm:$0xf]
  %v31 = vld [vmem:[%s1 + $0xc] sm:$0xf]
  %v32 = vld [vmem:[%s1 + $0x10] sm:$0xf]
  %v33 = vld [vmem:[%s1 + $0x14] sm:$0xf]
  %v34 = vld [vmem:[%s1 + $0x18] sm:$0xf]
  %v35 = vld [vmem:[%s1 + $0x1c] sm:$0xf]
  %v36 = vld [vmem:[%s1 + $0x20] sm:$0xf]
  %v37 = vld [vmem:[%s1 + $0x24] sm:$0xf]
  %v38 = vld [vmem:[%s1 + $0x28] sm:$0xf]
  %v39 = vld [vmem:[%s1 + $0x2c] sm:$0xf]
  %v40 = vld [vmem:[%s1 + $0x30] sm:$0xf]
  %v41 = vld [vmem:[%s1 + $0x34] sm:$0xf]
  %v42 = vld [vmem:[%s1 + $0x38] sm:$0xf]
  %v43 = vld [vmem:[%s1 + $0x3c] sm:$0xf]
  %v48 = vunpack.c.l.b16 %v24
  %v49 = vunpack.c.l.b16 %v25
  %v50 = vunpack.c.l.b16 %v26
  %v51 = vunpack.c.l.b16 %v27
  %v52 = vpack.c.b16 %v49, %v48
  %v53 = vpack.c.b16 %v51, %v50
  %v72 = vunpack.c.l.b16 %v28
  %v73 = vunpack.c.l.b16 %v29
  %v74 = vunpack.c.l.b16 %v30
  %v75 = vunpack.c.l.b16 %v31
  %v76 = vunpack.c.l.b16 %v32
  %v77 = vunpack.c.l.b16 %v33
  %v78 = vunpack.c.l.b16 %v34
  %v79 = vunpack.c.l.b16 %v35
  %v80 = vunpack.c.l.b16 %v36
  %v81 = vunpack.c.l.b16 %v37
  %v82 = vunpack.c.l.b16 %v38
  %v83 = vunpack.c.l.b16 %v39
  %v84 = vunpack.c.l.b16 %v40
  %v85 = vunpack.c.l.b16 %v41
  %v86 = vunpack.c.l.b16 %v42
  %v87 = vunpack.c.l.b16 %v43
  %v88 = vpack.c.b16 %v73, %v72
  %v89 = vpack.c.b16 %v75, %v74
  %v90 = vpack.c.b16 %v77, %v76
  %v91 = vpack.c.b16 %v79, %v78
  %v92 = vpack.c.b16 %v81, %v80
  %v93 = vpack.c.b16 %v83, %v82
  %v94 = vpack.c.b16 %v85, %v84
  %v95 = vpack.c.b16 %v87, %v86
  %104 = vmatprep.subr.bf16.mxu0 0
  %105 = vmatpush1.bf16.msra.mxu0 %v88
  %106 = vmatprep.subr.bf16.mxu0 0
  %107 = vmatpush1.bf16.msra.mxu0 %v89
  %108 = vmatprep.subr.bf16.mxu0 0
  %109 = vmatpush1.bf16.msra.mxu0 %v90
  %110 = vmatprep.subr.bf16.mxu0 0
  %111 = vmatpush1.bf16.msra.mxu0 %v91
  %112 = vmatprep.subr.bf16.mxu0 0
  %113 = vmatpush1.bf16.msra.mxu0 %v92
  %114 = vmatprep.subr.bf16.mxu0 0
  %115 = vmatpush1.bf16.msra.mxu0 %v93
  %116 = vmatprep.subr.bf16.mxu0 0
  %117 = vmatpush1.bf16.msra.mxu0 %v94
  %118 = vmatprep.subr.bf16.mxu0 0
  %119 = vmatpush1.bf16.msra.mxu0 %v95
  %120 = vmatprep.subr.bf16.mxu0 0
  %121 = vmatpush1.bf16.msra.mxu0 0
  %122 = vmatprep.subr.bf16.mxu0 0
  %123 = vmatpush1.bf16.msra.mxu0 0
  %124 = vmatprep.subr.bf16.mxu0 0
  %125 = vmatpush1.bf16.msra.mxu0 0
  %126 = vmatprep.subr.bf16.mxu0 0
  %127 = vmatpush1.bf16.msra.mxu0 0
  %128 = vmatprep.subr.bf16.mxu0 0
  %129 = vmatpush1.bf16.msra.mxu0 0
  %130 = vmatprep.subr.bf16.mxu0 0
  %131 = vmatpush1.bf16.msra.mxu0 0
  %132 = vmatprep.subr.bf16.mxu0 0
  %133 = vmatpush1.bf16.msra.mxu0 0
  %134 = vmatprep.subr.bf16.mxu0 0
  %135 = vmatpush1.bf16.msra.mxu0 0
  %136 = vmatprep.mubr.bf16.mxu0 0
  %137 = vmatmul.mubr.bf16.gmra.mrb[0].mxu0 %v52
  %v138 = vpop.f32.mrb[0].mxu0
  %v139 = vadd.f32 0.0, %v138
  %v140 = vpop.f32.mrb[0].mxu0
  %v141 = vpop.f32.mrb[0].mxu0
  %v142 = vadd.f32 0.0, %v141
  %v143 = vpop.f32.mrb[0].mxu0
  %144 = vmatprep.mubr.bf16.mxu0 0
  %145 = vmatmul.mubr.bf16.gmra.mrb[0].mxu0 %v53
  %v146 = vpop.f32.mrb[0].mxu0
  %v147 = vadd.f32 0.0, %v146
  %v148 = vpop.f32.mrb[0].mxu0
  %v149 = vpop.f32.mrb[0].mxu0
  %v150 = vadd.f32 0.0, %v149
  %v151 = vpop.f32.mrb[0].mxu0
  %152 = vdwg.mxu0
  %v153 = vadd.f32 %v20, %v139
  %v154 = vadd.f32 %v21, %v142
  %v155 = vadd.f32 %v22, %v147
  %v156 = vadd.f32 %v23, %v150
  %157 = vst [vmem:[#allocation2] sm:$0xff] %v153
  %158 = vst [vmem:[#allocation2 + $0x8] sm:$0xff] %v154
  %159 = vst [vmem:[#allocation2 + $0x10] sm:$0xff] %v155
  %160 = vst [vmem:[#allocation2 + $0x18] sm:$0xff] %v156
  // Predicated region
  $region14: #{fwd.10} parent=0 // pred_check
    %p161 = pneg %p12
  $region15: #{fwd.10} parent=0 // pred_check_branch
    %163 = sbr.rel (%p161) target = $region17
  $region16: #{fwd.10} parent=0 // pred_region
    %v164 = vld [vmem:[#allocation2] sm:$0xff]
    %v165 = vld [vmem:[#allocation2 + $0x8] sm:$0xff]
    %v166 = vld [vmem:[#allocation2 + $0x10] sm:$0xff]
    %v167 = vld [vmem:[#allocation2 + $0x18] sm:$0xff]
    %v168 = vadd.f32 %v164, %v165
    %v169 = vadd.f32 %v168, %v166
    %v170 = vadd.f32 %v169, %v167
    %v171 = vrot.slane %v170, 4
    %v172 = vadd.f32 %v170, %v171
    %v173 = vrot.slane %v172, 2
    %v174 = vadd.f32 %v172, %v173
    %v175 = vrot.slane %v174, 1
    %v176 = vadd.f32 %v174, %v175
    %v177 = vmul.f32 %v164, %v164
    %v178 = vmul.f32 %v165, %v165
    %v179 = vmul.f32 %v166, %v166
    %v180 = vmul.f32 %v167, %v167
    %v181 = vadd.f32 %v177, %v178
    %v182 = vadd.f32 %v181, %v179
    %v183 = vadd.f32 %v182, %v180
    %v184 = vrot.slane %v183, 4
    %v185 = vadd.f32 %v183, %v184
    %v186 = vrot.slane %v185, 2
    %v187 = vadd.f32 %v185, %v186
    %v188 = vrot.slane %v187, 1
    %v189 = vadd.f32 %v187, %v188
    %v190 = vmul.f32 %v176, 0.03125
    %v191 = vmul.f32 %v189, 0.03125
    %v192 = vmul.f32 %v190, %v190
    %v193 = vsub.f32 %v191, %v192
    %v194 = vmax.f32 %v193, 0.0
    %v195 = vsub.f32 %v164, %v190
    %v196 = vsub.f32 %v165, %v190
    %v197 = vsub.f32 %v166, %v190
    %v198 = vsub.f32 %v167, %v190
    %v199 = vadd.f32 %v194, 1e-05
    %v200 = vrsqrt.pop %v199
    %v201 = vmul.f32 %v195, %v200
    %v202 = vmul.f32 %v196, %v200
    %v203 = vmul.f32 %v197, %v200
    %v204 = vmul.f32 %v198, %v200
    %vm205 = vcmp.gt.f32.partialorder %v201, 0.0
    %vm206 = vcmp.gt.f32.partialorder %v202, 0.0
    %vm207 = vcmp.gt.f32.partialorder %v203, 0.0
    %vm208 = vcmp.gt.f32.partialorder %v204, 0.0
    %v209 = vmul.f32 %v201, 0.2
    %v210 = vmul.f32 %v202, 0.2
    %v211 = vmul.f32 %v203, 0.2
    %v212 = vmul.f32 %v204, 0.2
    %v213 = vsel %vm205, %v201, %v209
    %v214 = vsel %vm206, %v202, %v210
    %v215 = vsel %vm207, %v203, %v211
    %v216 = vsel %vm208, %v204, %v212
    %v217 = vpack.c.bf16 %v214, %v213
    %v218 = vpack.c.bf16 %v216, %v215
    %v221 = vunpack.c.l.b16 %v217
    %v222 = vunpack.c.h.b16 %v217
    %v223 = vunpack.c.l.b16 %v218
    %v224 = vunpack.c.h.b16 %v218
    %v225 = vpack.c.b16 %v221, %v221
    %v226 = vpack.c.b16 %v222, %v222
    %v227 = vpack.c.b16 %v223, %v223
    %v228 = vpack.c.b16 %v224, %v224
    %233 = vst [vmem:[%s2] sm:$0xf] %v225
    %234 = vst [vmem:[%s2 + $0x4] sm:$0xf] %v226
    %235 = vst [vmem:[%s2 + $0x8] sm:$0xf] %v227
    %236 = vst [vmem:[%s2 + $0xc] sm:$0xf] %v228
  $region17: #{fwd.10} parent=0 // pred_fallthru
    _
  // Predicated region
  $region18: #{fwd.10} parent=0 // pred_check
    _
  $region19: #{fwd.10} parent=0 // pred_check_branch
    %238 = sbr.rel (0) target = $region21
  $region20: #{fwd.10} parent=0 // pred_region
    _
  $region21: #{fwd.10} parent=0 // pred_fallthru
    _
  // Predicated region
  $region22: #{fwd.10} parent=0 // pred_check
    _
  $region23: #{fwd.10} parent=0 // pred_check_branch
    %240 = sbr.rel (0) target = $region25
  $region24: #{fwd.10} parent=0 // pred_region
    _
  $region25: #{fwd.10} parent=0 // pred_fallthru
    _

// kernel: fwd.11
$region0: #{fwd.11}
  #allocation0 [shape = 'u32[]', space=smem, size = 0x4, offset = 0x4, fixed_abs, tag = 'smem constant byte address 0x4 - core index']
  #allocation1 [shape = 'u32[144,128]{1,0:T(1,128)}', space=vmem, size = 0x12000, scoped, tag = 'internal scratch']
  #allocation2 [shape = 'f32[8,128]{1,0:T(8,128)}', space=vmem, size = 0x1000, scoped, tag = 'scratch operand']
  %s0 = inlined_call_operand.vmem [shape: bf16[8,256], index: 0, kind: input, shape index: {}]
  %s1 = inlined_call_operand.vmem [shape: bf16[256,128], index: 1, kind: input, shape index: {}]
  %s2 = inlined_call_operand.vmem [shape: f32[8,128], index: 2, kind: output, shape index: {}]
  %s3 = sld [smem:[#allocation0]]
  $region26: #{fwd.11} parent=0
    _
  %s5 = ssub.s32 1, %s3
  %s6 = scalar_select 0, %s5, %s3
  // Predicated region
  $region2: #{fwd.11} parent=0 // pred_check
    _
  $region3: #{fwd.11} parent=0 // pred_check_branch
    %8 = sbr.rel (0) target = $region5
  $region4: #{fwd.11} parent=0 // pred_region
    _
  $region5: #{fwd.11} parent=0 // pred_fallthru
    _
  // Predicated region
  $region6: #{fwd.11} parent=0 // pred_check
    _
  $region7: #{fwd.11} parent=0 // pred_check_branch
    %10 = sbr.rel (0) target = $region9
  $region8: #{fwd.11} parent=0 // pred_region
    _
  $region9: #{fwd.11} parent=0 // pred_fallthru
    _
  %p12 = scmp.eq.s32.totalorder 0, 0
  // Predicated region
  $region10: #{fwd.11} parent=0 // pred_check
    %p13 = pneg %p12
  $region11: #{fwd.11} parent=0 // pred_check_branch
    %15 = sbr.rel (%p13) target = $region13
  $region12: #{fwd.11} parent=0 // pred_region
    %16 = vst [vmem:[#allocation2] sm:$0xff] 0.0
  $region13: #{fwd.11} parent=0 // pred_fallthru
    _
  %v17 = vld [vmem:[#allocation2] sm:$0xff]
  %v18 = vld [vmem:[%s0] sm:$0xff]
  %v19 = vld [vmem:[%s1] sm:$0xf]
  %v20 = vld [vmem:[%s1 + $0x4] sm:$0xf]
  %v21 = vld [vmem:[%s1 + $0x8] sm:$0xf]
  %v22 = vld [vmem:[%s1 + $0xc] sm:$0xf]
  %v23 = vld [vmem:[%s1 + $0x10] sm:$0xf]
  %v24 = vld [vmem:[%s1 + $0x14] sm:$0xf]
  %v25 = vld [vmem:[%s1 + $0x18] sm:$0xf]
  %v26 = vld [vmem:[%s1 + $0x1c] sm:$0xf]
  %v27 = vld [vmem:[%s1 + $0x20] sm:$0xf]
  %v28 = vld [vmem:[%s1 + $0x24] sm:$0xf]
  %v29 = vld [vmem:[%s1 + $0x28] sm:$0xf]
  %v30 = vld [vmem:[%s1 + $0x2c] sm:$0xf]
  %v31 = vld [vmem:[%s1 + $0x30] sm:$0xf]
  %v32 = vld [vmem:[%s1 + $0x34] sm:$0xf]
  %v33 = vld [vmem:[%s1 + $0x38] sm:$0xf]
  %v34 = vld [vmem:[%s1 + $0x3c] sm:$0xf]
  %v35 = vld [vmem:[%s1 + $0x40] sm:$0xf]
  %v36 = vld [vmem:[%s1 + $0x44] sm:$0xf]
  %v37 = vld [vmem:[%s1 + $0x48] sm:$0xf]
  %v38 = vld [vmem:[%s1 + $0x4c] sm:$0xf]
  %v39 = vld [vmem:[%s1 + $0x50] sm:$0xf]
  %v40 = vld [vmem:[%s1 + $0x54] sm:$0xf]
  %v41 = vld [vmem:[%s1 + $0x58] sm:$0xf]
  %v42 = vld [vmem:[%s1 + $0x5c] sm:$0xf]
  %v43 = vld [vmem:[%s1 + $0x60] sm:$0xf]
  %v44 = vld [vmem:[%s1 + $0x64] sm:$0xf]
  %v45 = vld [vmem:[%s1 + $0x68] sm:$0xf]
  %v46 = vld [vmem:[%s1 + $0x6c] sm:$0xf]
  %v47 = vld [vmem:[%s1 + $0x70] sm:$0xf]
  %v48 = vld [vmem:[%s1 + $0x74] sm:$0xf]
  %v49 = vld [vmem:[%s1 + $0x78] sm:$0xf]
  %v50 = vld [vmem:[%s1 + $0x7c] sm:$0xf]
  %v52 = vunpack.c.l.b16 %v18
  %v53 = vunpack.c.h.b16 %v18
  %v54 = vpack.c.b16 %v52, %v52
  %v55 = vpack.c.b16 %v53, %v53
  %v90 = vunpack.c.l.b16 %v19
  %v91 = vunpack.c.l.b16 %v20
  %v92 = vunpack.c.l.b16 %v21
  %v93 = vunpack.c.l.b16 %v22
  %v94 = vunpack.c.l.b16 %v23
  %v95 = vunpack.c.l.b16 %v24
  %v96 = vunpack.c.l.b16 %v25
  %v97 = vunpack.c.l.b16 %v26
  %v98 = vunpack.c.l.b16 %v27
  %v99 = vunpack.c.l.b16 %v28
  %v100 = vunpack.c.l.b16 %v29
  %v101 = vunpack.c.l.b16 %v30
  %v102 = vunpack.c.l.b16 %v31
  %v103 = vunpack.c.l.b16 %v32
  %v104 = vunpack.c.l.b16 %v33
  %v105 = vunpack.c.l.b16 %v34
  %v106 = vunpack.c.l.b16 %v35
  %v107 = vunpack.c.l.b16 %v36
  %v108 = vunpack.c.l.b16 %v37
  %v109 = vunpack.c.l.b16 %v38
  %v110 = vunpack.c.l.b16 %v39
  %v111 = vunpack.c.l.b16 %v40
  %v112 = vunpack.c.l.b16 %v41
  %v113 = vunpack.c.l.b16 %v42
  %v114 = vunpack.c.l.b16 %v43
  %v115 = vunpack.c.l.b16 %v44
  %v116 = vunpack.c.l.b16 %v45
  %v117 = vunpack.c.l.b16 %v46
  %v118 = vunpack.c.l.b16 %v47
  %v119 = vunpack.c.l.b16 %v48
  %v120 = vunpack.c.l.b16 %v49
  %v121 = vunpack.c.l.b16 %v50
  %v122 = vpack.c.b16 %v91, %v90
  %v123 = vpack.c.b16 %v93, %v92
  %v124 = vpack.c.b16 %v95, %v94
  %v125 = vpack.c.b16 %v97, %v96
  %v126 = vpack.c.b16 %v99, %v98
  %v127 = vpack.c.b16 %v101, %v100
  %v128 = vpack.c.b16 %v103, %v102
  %v129 = vpack.c.b16 %v105, %v104
  %v130 = vpack.c.b16 %v107, %v106
  %v131 = vpack.c.b16 %v109, %v108
  %v132 = vpack.c.b16 %v111, %v110
  %v133 = vpack.c.b16 %v113, %v112
  %v134 = vpack.c.b16 %v115, %v114
  %v135 = vpack.c.b16 %v117, %v116
  %v136 = vpack.c.b16 %v119, %v118
  %v137 = vpack.c.b16 %v121, %v120
  %154 = vmatprep.subr.bf16.mxu0 0
  %155 = vmatpush1.bf16.msra.mxu0 %v122
  %156 = vmatprep.subr.bf16.mxu0 0
  %157 = vmatpush1.bf16.msra.mxu0 %v123
  %158 = vmatprep.subr.bf16.mxu0 0
  %159 = vmatpush1.bf16.msra.mxu0 %v124
  %160 = vmatprep.subr.bf16.mxu0 0
  %161 = vmatpush1.bf16.msra.mxu0 %v125
  %162 = vmatprep.subr.bf16.mxu0 0
  %163 = vmatpush1.bf16.msra.mxu0 %v126
  %164 = vmatprep.subr.bf16.mxu0 0
  %165 = vmatpush1.bf16.msra.mxu0 %v127
  %166 = vmatprep.subr.bf16.mxu0 0
  %167 = vmatpush1.bf16.msra.mxu0 %v128
  %168 = vmatprep.subr.bf16.mxu0 0
  %169 = vmatpush1.bf16.msra.mxu0 %v129
  %170 = vmatprep.subr.bf16.mxu0 0
  %171 = vmatpush1.bf16.msra.mxu0 %v130
  %172 = vmatprep.subr.bf16.mxu0 0
  %173 = vmatpush1.bf16.msra.mxu0 %v131
  %174 = vmatprep.subr.bf16.mxu0 0
  %175 = vmatpush1.bf16.msra.mxu0 %v132
  %176 = vmatprep.subr.bf16.mxu0 0
  %177 = vmatpush1.bf16.msra.mxu0 %v133
  %178 = vmatprep.subr.bf16.mxu0 0
  %179 = vmatpush1.bf16.msra.mxu0 %v134
  %180 = vmatprep.subr.bf16.mxu0 0
  %181 = vmatpush1.bf16.msra.mxu0 %v135
  %182 = vmatprep.subr.bf16.mxu0 0
  %183 = vmatpush1.bf16.msra.mxu0 %v136
  %184 = vmatprep.subr.bf16.mxu0 0
  %185 = vmatpush1.bf16.msra.mxu0 %v137
  %186 = vmatprep.mubr.bf16.mxu0 %v55
  %187 = vmatmul.mubr.bf16.gmra.mrb[0].mxu0 %v54
  %v188 = vpop.f32.mrb[0].mxu0
  %v189 = vadd.f32 0.0, %v188
  %v190 = vpop.f32.mrb[0].mxu0
  %v191 = vpop.f32.mrb[0].mxu0
  %v192 = vpop.f32.mrb[0].mxu0
  %193 = vdwg.mxu0
  %v194 = vadd.f32 %v17, %v189
  %195 = vst [vmem:[#allocation2] sm:$0xff] %v194
  // Predicated region
  $region14: #{fwd.11} parent=0 // pred_check
    %p196 = pneg %p12
  $region15: #{fwd.11} parent=0 // pred_check_branch
    %198 = sbr.rel (%p196) target = $region17
  $region16: #{fwd.11} parent=0 // pred_region
    %v199 = vld [vmem:[#allocation2] sm:$0xff]
    %200 = vst [vmem:[%s2] sm:$0xff] %v199
  $region17: #{fwd.11} parent=0 // pred_fallthru
    _
  // Predicated region
  $region18: #{fwd.11} parent=0 // pred_check
    _
  $region19: #{fwd.11} parent=0 // pred_check_branch
    %202 = sbr.rel (0) target = $region21
  $region20: #{fwd.11} parent=0 // pred_region
    _
  $region21: #{fwd.11} parent=0 // pred_fallthru
    _
  // Predicated region
  $region22: #{fwd.11} parent=0 // pred_check
    _
  $region23: #{fwd.11} parent=0 // pred_check_branch
    %204 = sbr.rel (0) target = $region25
  $region24: #{fwd.11} parent=0 // pred_region
    _
  $region25: #{fwd.11} parent=0 // pred_fallthru
    _

// kernel: fwd.12
$region0: #{fwd.12}
  #allocation0 [shape = 'u32[]', space=smem, size = 0x4, offset = 0x4, fixed_abs, tag = 'smem constant byte address 0x4 - core index']
  #allocation1 [shape = 'u32[144,128]{1,0:T(1,128)}', space=vmem, size = 0x12000, scoped, tag = 'internal scratch']
  #allocation2 [shape = 'f32[32,128]{1,0:T(8,128)}', space=vmem, size = 0x4000, scoped, tag = 'scratch operand']
  %s0 = inlined_call_operand.vmem [shape: bf16[32,128], index: 0, kind: input, shape index: {}]
  %s1 = inlined_call_operand.vmem [shape: bf16[128,128], index: 1, kind: input, shape index: {}]
  %s2 = inlined_call_operand.vmem [shape: bf16[32,128], index: 2, kind: output, shape index: {}]
  %s3 = sld [smem:[#allocation0]]
  $region26: #{fwd.12} parent=0
    _
  %s5 = ssub.s32 1, %s3
  %s6 = scalar_select 0, %s5, %s3
  // Predicated region
  $region2: #{fwd.12} parent=0 // pred_check
    _
  $region3: #{fwd.12} parent=0 // pred_check_branch
    %8 = sbr.rel (0) target = $region5
  $region4: #{fwd.12} parent=0 // pred_region
    _
  $region5: #{fwd.12} parent=0 // pred_fallthru
    _
  // Predicated region
  $region6: #{fwd.12} parent=0 // pred_check
    _
  $region7: #{fwd.12} parent=0 // pred_check_branch
    %10 = sbr.rel (0) target = $region9
  $region8: #{fwd.12} parent=0 // pred_region
    _
  $region9: #{fwd.12} parent=0 // pred_fallthru
    _
  %p12 = scmp.eq.s32.totalorder 0, 0
  // Predicated region
  $region10: #{fwd.12} parent=0 // pred_check
    %p13 = pneg %p12
  $region11: #{fwd.12} parent=0 // pred_check_branch
    %15 = sbr.rel (%p13) target = $region13
  $region12: #{fwd.12} parent=0 // pred_region
    %16 = vst [vmem:[#allocation2] sm:$0xff] 0.0
    %17 = vst [vmem:[#allocation2 + $0x8] sm:$0xff] 0.0
    %18 = vst [vmem:[#allocation2 + $0x10] sm:$0xff] 0.0
    %19 = vst [vmem:[#allocation2 + $0x18] sm:$0xff] 0.0
  $region13: #{fwd.12} parent=0 // pred_fallthru
    _
  %v20 = vld [vmem:[#allocation2] sm:$0xff]
  %v21 = vld [vmem:[#allocation2 + $0x8] sm:$0xff]
  %v22 = vld [vmem:[#allocation2 + $0x10] sm:$0xff]
  %v23 = vld [vmem:[#allocation2 + $0x18] sm:$0xff]
  %v24 = vld [vmem:[%s0] sm:$0xf]
  %v25 = vld [vmem:[%s0 + $0x4] sm:$0xf]
  %v26 = vld [vmem:[%s0 + $0x8] sm:$0xf]
  %v27 = vld [vmem:[%s0 + $0xc] sm:$0xf]
  %v28 = vld [vmem:[%s1] sm:$0xf]
  %v29 = vld [vmem:[%s1 + $0x4] sm:$0xf]
  %v30 = vld [vmem:[%s1 + $0x8] sm:$0xf]
  %v31 = vld [vmem:[%s1 + $0xc] sm:$0xf]
  %v32 = vld [vmem:[%s1 + $0x10] sm:$0xf]
  %v33 = vld [vmem:[%s1 + $0x14] sm:$0xf]
  %v34 = vld [vmem:[%s1 + $0x18] sm:$0xf]
  %v35 = vld [vmem:[%s1 + $0x1c] sm:$0xf]
  %v36 = vld [vmem:[%s1 + $0x20] sm:$0xf]
  %v37 = vld [vmem:[%s1 + $0x24] sm:$0xf]
  %v38 = vld [vmem:[%s1 + $0x28] sm:$0xf]
  %v39 = vld [vmem:[%s1 + $0x2c] sm:$0xf]
  %v40 = vld [vmem:[%s1 + $0x30] sm:$0xf]
  %v41 = vld [vmem:[%s1 + $0x34] sm:$0xf]
  %v42 = vld [vmem:[%s1 + $0x38] sm:$0xf]
  %v43 = vld [vmem:[%s1 + $0x3c] sm:$0xf]
  %v48 = vunpack.c.l.b16 %v24
  %v49 = vunpack.c.l.b16 %v25
  %v50 = vunpack.c.l.b16 %v26
  %v51 = vunpack.c.l.b16 %v27
  %v52 = vpack.c.b16 %v49, %v48
  %v53 = vpack.c.b16 %v51, %v50
  %v72 = vunpack.c.l.b16 %v28
  %v73 = vunpack.c.l.b16 %v29
  %v74 = vunpack.c.l.b16 %v30
  %v75 = vunpack.c.l.b16 %v31
  %v76 = vunpack.c.l.b16 %v32
  %v77 = vunpack.c.l.b16 %v33
  %v78 = vunpack.c.l.b16 %v34
  %v79 = vunpack.c.l.b16 %v35
  %v80 = vunpack.c.l.b16 %v36
  %v81 = vunpack.c.l.b16 %v37
  %v82 = vunpack.c.l.b16 %v38
  %v83 = vunpack.c.l.b16 %v39
  %v84 = vunpack.c.l.b16 %v40
  %v85 = vunpack.c.l.b16 %v41
  %v86 = vunpack.c.l.b16 %v42
  %v87 = vunpack.c.l.b16 %v43
  %v88 = vpack.c.b16 %v73, %v72
  %v89 = vpack.c.b16 %v75, %v74
  %v90 = vpack.c.b16 %v77, %v76
  %v91 = vpack.c.b16 %v79, %v78
  %v92 = vpack.c.b16 %v81, %v80
  %v93 = vpack.c.b16 %v83, %v82
  %v94 = vpack.c.b16 %v85, %v84
  %v95 = vpack.c.b16 %v87, %v86
  %104 = vmatprep.subr.bf16.mxu0 0
  %105 = vmatpush1.bf16.msra.mxu0 %v88
  %106 = vmatprep.subr.bf16.mxu0 0
  %107 = vmatpush1.bf16.msra.mxu0 %v89
  %108 = vmatprep.subr.bf16.mxu0 0
  %109 = vmatpush1.bf16.msra.mxu0 %v90
  %110 = vmatprep.subr.bf16.mxu0 0
  %111 = vmatpush1.bf16.msra.mxu0 %v91
  %112 = vmatprep.subr.bf16.mxu0 0
  %113 = vmatpush1.bf16.msra.mxu0 %v92
  %114 = vmatprep.subr.bf16.mxu0 0
  %115 = vmatpush1.bf16.msra.mxu0 %v93
  %116 = vmatprep.subr.bf16.mxu0 0
  %117 = vmatpush1.bf16.msra.mxu0 %v94
  %118 = vmatprep.subr.bf16.mxu0 0
  %119 = vmatpush1.bf16.msra.mxu0 %v95
  %120 = vmatprep.subr.bf16.mxu0 0
  %121 = vmatpush1.bf16.msra.mxu0 0
  %122 = vmatprep.subr.bf16.mxu0 0
  %123 = vmatpush1.bf16.msra.mxu0 0
  %124 = vmatprep.subr.bf16.mxu0 0
  %125 = vmatpush1.bf16.msra.mxu0 0
  %126 = vmatprep.subr.bf16.mxu0 0
  %127 = vmatpush1.bf16.msra.mxu0 0
  %128 = vmatprep.subr.bf16.mxu0 0
  %129 = vmatpush1.bf16.msra.mxu0 0
  %130 = vmatprep.subr.bf16.mxu0 0
  %131 = vmatpush1.bf16.msra.mxu0 0
  %132 = vmatprep.subr.bf16.mxu0 0
  %133 = vmatpush1.bf16.msra.mxu0 0
  %134 = vmatprep.subr.bf16.mxu0 0
  %135 = vmatpush1.bf16.msra.mxu0 0
  %136 = vmatprep.mubr.bf16.mxu0 0
  %137 = vmatmul.mubr.bf16.gmra.mrb[0].mxu0 %v52
  %v138 = vpop.f32.mrb[0].mxu0
  %v139 = vadd.f32 0.0, %v138
  %v140 = vpop.f32.mrb[0].mxu0
  %v141 = vpop.f32.mrb[0].mxu0
  %v142 = vadd.f32 0.0, %v141
  %v143 = vpop.f32.mrb[0].mxu0
  %144 = vmatprep.mubr.bf16.mxu0 0
  %145 = vmatmul.mubr.bf16.gmra.mrb[0].mxu0 %v53
  %v146 = vpop.f32.mrb[0].mxu0
  %v147 = vadd.f32 0.0, %v146
  %v148 = vpop.f32.mrb[0].mxu0
  %v149 = vpop.f32.mrb[0].mxu0
  %v150 = vadd.f32 0.0, %v149
  %v151 = vpop.f32.mrb[0].mxu0
  %152 = vdwg.mxu0
  %v153 = vadd.f32 %v20, %v139
  %v154 = vadd.f32 %v21, %v142
  %v155 = vadd.f32 %v22, %v147
  %v156 = vadd.f32 %v23, %v150
  %157 = vst [vmem:[#allocation2] sm:$0xff] %v153
  %158 = vst [vmem:[#allocation2 + $0x8] sm:$0xff] %v154
  %159 = vst [vmem:[#allocation2 + $0x10] sm:$0xff] %v155
  %160 = vst [vmem:[#allocation2 + $0x18] sm:$0xff] %v156
  // Predicated region
  $region14: #{fwd.12} parent=0 // pred_check
    %p161 = pneg %p12
  $region15: #{fwd.12} parent=0 // pred_check_branch
    %163 = sbr.rel (%p161) target = $region17
  $region16: #{fwd.12} parent=0 // pred_region
    %v164 = vld [vmem:[#allocation2] sm:$0xff]
    %v165 = vld [vmem:[#allocation2 + $0x8] sm:$0xff]
    %v166 = vld [vmem:[#allocation2 + $0x10] sm:$0xff]
    %v167 = vld [vmem:[#allocation2 + $0x18] sm:$0xff]
    %v168 = vadd.f32 %v164, %v165
    %v169 = vadd.f32 %v168, %v166
    %v170 = vadd.f32 %v169, %v167
    %v171 = vrot.slane %v170, 4
    %v172 = vadd.f32 %v170, %v171
    %v173 = vrot.slane %v172, 2
    %v174 = vadd.f32 %v172, %v173
    %v175 = vrot.slane %v174, 1
    %v176 = vadd.f32 %v174, %v175
    %v177 = vmul.f32 %v164, %v164
    %v178 = vmul.f32 %v165, %v165
    %v179 = vmul.f32 %v166, %v166
    %v180 = vmul.f32 %v167, %v167
    %v181 = vadd.f32 %v177, %v178
    %v182 = vadd.f32 %v181, %v179
    %v183 = vadd.f32 %v182, %v180
    %v184 = vrot.slane %v183, 4
    %v185 = vadd.f32 %v183, %v184
    %v186 = vrot.slane %v185, 2
    %v187 = vadd.f32 %v185, %v186
    %v188 = vrot.slane %v187, 1
    %v189 = vadd.f32 %v187, %v188
    %v190 = vmul.f32 %v176, 0.03125
    %v191 = vmul.f32 %v189, 0.03125
    %v192 = vmul.f32 %v190, %v190
    %v193 = vsub.f32 %v191, %v192
    %v194 = vmax.f32 %v193, 0.0
    %v195 = vsub.f32 %v164, %v190
    %v196 = vsub.f32 %v165, %v190
    %v197 = vsub.f32 %v166, %v190
    %v198 = vsub.f32 %v167, %v190
    %v199 = vadd.f32 %v194, 1e-05
    %v200 = vrsqrt.pop %v199
    %v201 = vmul.f32 %v195, %v200
    %v202 = vmul.f32 %v196, %v200
    %v203 = vmul.f32 %v197, %v200
    %v204 = vmul.f32 %v198, %v200
    %v205 = vmax.f32 %v201, 0.0
    %v206 = vmax.f32 %v202, 0.0
    %v207 = vmax.f32 %v203, 0.0
    %v208 = vmax.f32 %v204, 0.0
    %v209 = vpack.c.bf16 %v206, %v205
    %v210 = vpack.c.bf16 %v208, %v207
    %v213 = vunpack.c.l.b16 %v209
    %v214 = vunpack.c.h.b16 %v209
    %v215 = vunpack.c.l.b16 %v210
    %v216 = vunpack.c.h.b16 %v210
    %v217 = vpack.c.b16 %v213, %v213
    %v218 = vpack.c.b16 %v214, %v214
    %v219 = vpack.c.b16 %v215, %v215
    %v220 = vpack.c.b16 %v216, %v216
    %225 = vst [vmem:[%s2] sm:$0xf] %v217
    %226 = vst [vmem:[%s2 + $0x4] sm:$0xf] %v218
    %227 = vst [vmem:[%s2 + $0x8] sm:$0xf] %v219
    %228 = vst [vmem:[%s2 + $0xc] sm:$0xf] %v220
  $region17: #{fwd.12} parent=0 // pred_fallthru
    _
  // Predicated region
  $region18: #{fwd.12} parent=0 // pred_check
    _
  $region19: #{fwd.12} parent=0 // pred_check_branch
    %230 = sbr.rel (0) target = $region21
  $region20: #{fwd.12} parent=0 // pred_region
    _
  $region21: #{fwd.12} parent=0 // pred_fallthru
    _
  // Predicated region
  $region22: #{fwd.12} parent=0 // pred_check
    _
  $region23: #{fwd.12} parent=0 // pred_check_branch
    %232 = sbr.rel (0) target = $region25
  $region24: #{fwd.12} parent=0 // pred_region
    _
  $region25: #{fwd.12} parent=0 // pred_fallthru
    _

// kernel: fwd.13
$region0: #{fwd.13}
  #allocation0 [shape = 'u32[]', space=smem, size = 0x4, offset = 0x4, fixed_abs, tag = 'smem constant byte address 0x4 - core index']
  #allocation1 [shape = 'u32[144,128]{1,0:T(1,128)}', space=vmem, size = 0x12000, scoped, tag = 'internal scratch']
  #allocation2 [shape = 'f32[32,128]{1,0:T(8,128)}', space=vmem, size = 0x4000, scoped, tag = 'scratch operand']
  %s0 = inlined_call_operand.vmem [shape: bf16[32,256], index: 0, kind: input, shape index: {}]
  %s1 = inlined_call_operand.vmem [shape: bf16[256,128], index: 1, kind: input, shape index: {}]
  %s2 = inlined_call_operand.vmem [shape: bf16[32,128], index: 2, kind: output, shape index: {}]
  %s3 = sld [smem:[#allocation0]]
  $region26: #{fwd.13} parent=0
    _
  %s5 = ssub.s32 1, %s3
  %s6 = scalar_select 0, %s5, %s3
  // Predicated region
  $region2: #{fwd.13} parent=0 // pred_check
    _
  $region3: #{fwd.13} parent=0 // pred_check_branch
    %8 = sbr.rel (0) target = $region5
  $region4: #{fwd.13} parent=0 // pred_region
    _
  $region5: #{fwd.13} parent=0 // pred_fallthru
    _
  // Predicated region
  $region6: #{fwd.13} parent=0 // pred_check
    _
  $region7: #{fwd.13} parent=0 // pred_check_branch
    %10 = sbr.rel (0) target = $region9
  $region8: #{fwd.13} parent=0 // pred_region
    _
  $region9: #{fwd.13} parent=0 // pred_fallthru
    _
  %p12 = scmp.eq.s32.totalorder 0, 0
  // Predicated region
  $region10: #{fwd.13} parent=0 // pred_check
    %p13 = pneg %p12
  $region11: #{fwd.13} parent=0 // pred_check_branch
    %15 = sbr.rel (%p13) target = $region13
  $region12: #{fwd.13} parent=0 // pred_region
    %16 = vst [vmem:[#allocation2] sm:$0xff] 0.0
    %17 = vst [vmem:[#allocation2 + $0x8] sm:$0xff] 0.0
    %18 = vst [vmem:[#allocation2 + $0x10] sm:$0xff] 0.0
    %19 = vst [vmem:[#allocation2 + $0x18] sm:$0xff] 0.0
  $region13: #{fwd.13} parent=0 // pred_fallthru
    _
  %v20 = vld [vmem:[#allocation2] sm:$0xff]
  %v21 = vld [vmem:[#allocation2 + $0x8] sm:$0xff]
  %v22 = vld [vmem:[#allocation2 + $0x10] sm:$0xff]
  %v23 = vld [vmem:[#allocation2 + $0x18] sm:$0xff]
  %v24 = vld [vmem:[%s0] sm:$0xff]
  %v25 = vld [vmem:[%s0 + $0x8] sm:$0xff]
  %v26 = vld [vmem:[%s0 + $0x10] sm:$0xff]
  %v27 = vld [vmem:[%s0 + $0x18] sm:$0xff]
  %v28 = vld [vmem:[%s1] sm:$0xf]
  %v29 = vld [vmem:[%s1 + $0x4] sm:$0xf]
  %v30 = vld [vmem:[%s1 + $0x8] sm:$0xf]
  %v31 = vld [vmem:[%s1 + $0xc] sm:$0xf]
  %v32 = vld [vmem:[%s1 + $0x10] sm:$0xf]
  %v33 = vld [vmem:[%s1 + $0x14] sm:$0xf]
  %v34 = vld [vmem:[%s1 + $0x18] sm:$0xf]
  %v35 = vld [vmem:[%s1 + $0x1c] sm:$0xf]
  %v36 = vld [vmem:[%s1 + $0x20] sm:$0xf]
  %v37 = vld [vmem:[%s1 + $0x24] sm:$0xf]
  %v38 = vld [vmem:[%s1 + $0x28] sm:$0xf]
  %v39 = vld [vmem:[%s1 + $0x2c] sm:$0xf]
  %v40 = vld [vmem:[%s1 + $0x30] sm:$0xf]
  %v41 = vld [vmem:[%s1 + $0x34] sm:$0xf]
  %v42 = vld [vmem:[%s1 + $0x38] sm:$0xf]
  %v43 = vld [vmem:[%s1 + $0x3c] sm:$0xf]
  %v44 = vld [vmem:[%s1 + $0x40] sm:$0xf]
  %v45 = vld [vmem:[%s1 + $0x44] sm:$0xf]
  %v46 = vld [vmem:[%s1 + $0x48] sm:$0xf]
  %v47 = vld [vmem:[%s1 + $0x4c] sm:$0xf]
  %v48 = vld [vmem:[%s1 + $0x50] sm:$0xf]
  %v49 = vld [vmem:[%s1 + $0x54] sm:$0xf]
  %v50 = vld [vmem:[%s1 + $0x58] sm:$0xf]
  %v51 = vld [vmem:[%s1 + $0x5c] sm:$0xf]
  %v52 = vld [vmem:[%s1 + $0x60] sm:$0xf]
  %v53 = vld [vmem:[%s1 + $0x64] sm:$0xf]
  %v54 = vld [vmem:[%s1 + $0x68] sm:$0xf]
  %v55 = vld [vmem:[%s1 + $0x6c] sm:$0xf]
  %v56 = vld [vmem:[%s1 + $0x70] sm:$0xf]
  %v57 = vld [vmem:[%s1 + $0x74] sm:$0xf]
  %v58 = vld [vmem:[%s1 + $0x78] sm:$0xf]
  %v59 = vld [vmem:[%s1 + $0x7c] sm:$0xf]
  %v64 = vunpack.c.l.b16 %v24
  %v65 = vunpack.c.h.b16 %v24
  %v66 = vunpack.c.l.b16 %v25
  %v67 = vunpack.c.h.b16 %v25
  %v68 = vunpack.c.l.b16 %v26
  %v69 = vunpack.c.h.b16 %v26
  %v70 = vunpack.c.l.b16 %v27
  %v71 = vunpack.c.h.b16 %v27
  %v72 = vpack.c.b16 %v66, %v64
  %v73 = vpack.c.b16 %v67, %v65
  %v74 = vpack.c.b16 %v70, %v68
  %v75 = vpack.c.b16 %v71, %v69
  %v112 = vunpack.c.l.b16 %v28
  %v113 = vunpack.c.l.b16 %v29
  %v114 = vunpack.c.l.b16 %v30
  %v115 = vunpack.c.l.b16 %v31
  %v116 = vunpack.c.l.b16 %v32
  %v117 = vunpack.c.l.b16 %v33
  %v118 = vunpack.c.l.b16 %v34
  %v119 = vunpack.c.l.b16 %v35
  %v120 = vunpack.c.l.b16 %v36
  %v121 = vunpack.c.l.b16 %v37
  %v122 = vunpack.c.l.b16 %v38
  %v123 = vunpack.c.l.b16 %v39
  %v124 = vunpack.c.l.b16 %v40
  %v125 = vunpack.c.l.b16 %v41
  %v126 = vunpack.c.l.b16 %v42
  %v127 = vunpack.c.l.b16 %v43
  %v128 = vunpack.c.l.b16 %v44
  %v129 = vunpack.c.l.b16 %v45
  %v130 = vunpack.c.l.b16 %v46
  %v131 = vunpack.c.l.b16 %v47
  %v132 = vunpack.c.l.b16 %v48
  %v133 = vunpack.c.l.b16 %v49
  %v134 = vunpack.c.l.b16 %v50
  %v135 = vunpack.c.l.b16 %v51
  %v136 = vunpack.c.l.b16 %v52
  %v137 = vunpack.c.l.b16 %v53
  %v138 = vunpack.c.l.b16 %v54
  %v139 = vunpack.c.l.b16 %v55
  %v140 = vunpack.c.l.b16 %v56
  %v141 = vunpack.c.l.b16 %v57
  %v142 = vunpack.c.l.b16 %v58
  %v143 = vunpack.c.l.b16 %v59
  %v144 = vpack.c.b16 %v113, %v112
  %v145 = vpack.c.b16 %v115, %v114
  %v146 = vpack.c.b16 %v117, %v116
  %v147 = vpack.c.b16 %v119, %v118
  %v148 = vpack.c.b16 %v121, %v120
  %v149 = vpack.c.b16 %v123, %v122
  %v150 = vpack.c.b16 %v125, %v124
  %v151 = vpack.c.b16 %v127, %v126
  %v152 = vpack.c.b16 %v129, %v128
  %v153 = vpack.c.b16 %v131, %v130
  %v154 = vpack.c.b16 %v133, %v132
  %v155 = vpack.c.b16 %v135, %v134
  %v156 = vpack.c.b16 %v137, %v136
  %v157 = vpack.c.b16 %v139, %v138
  %v158 = vpack.c.b16 %v141, %v140
  %v159 = vpack.c.b16 %v143, %v142
  %176 = vmatprep.subr.bf16.mxu0 0
  %177 = vmatpush1.bf16.msra.mxu0 %v144
  %178 = vmatprep.subr.bf16.mxu0 0
  %179 = vmatpush1.bf16.msra.mxu0 %v145
  %180 = vmatprep.subr.bf16.mxu0 0
  %181 = vmatpush1.bf16.msra.mxu0 %v146
  %182 = vmatprep.subr.bf16.mxu0 0
  %183 = vmatpush1.bf16.msra.mxu0 %v147
  %184 = vmatprep.subr.bf16.mxu0 0
  %185 = vmatpush1.bf16.msra.mxu0 %v148
  %186 = vmatprep.subr.bf16.mxu0 0
  %187 = vmatpush1.bf16.msra.mxu0 %v149
  %188 = vmatprep.subr.bf16.mxu0 0
  %189 = vmatpush1.bf16.msra.mxu0 %v150
  %190 = vmatprep.subr.bf16.mxu0 0
  %191 = vmatpush1.bf16.msra.mxu0 %v151
  %192 = vmatprep.subr.bf16.mxu0 0
  %193 = vmatpush1.bf16.msra.mxu0 %v152
  %194 = vmatprep.subr.bf16.mxu0 0
  %195 = vmatpush1.bf16.msra.mxu0 %v153
  %196 = vmatprep.subr.bf16.mxu0 0
  %197 = vmatpush1.bf16.msra.mxu0 %v154
  %198 = vmatprep.subr.bf16.mxu0 0
  %199 = vmatpush1.bf16.msra.mxu0 %v155
  %200 = vmatprep.subr.bf16.mxu0 0
  %201 = vmatpush1.bf16.msra.mxu0 %v156
  %202 = vmatprep.subr.bf16.mxu0 0
  %203 = vmatpush1.bf16.msra.mxu0 %v157
  %204 = vmatprep.subr.bf16.mxu0 0
  %205 = vmatpush1.bf16.msra.mxu0 %v158
  %206 = vmatprep.subr.bf16.mxu0 0
  %207 = vmatpush1.bf16.msra.mxu0 %v159
  %208 = vmatprep.mubr.bf16.mxu0 %v73
  %209 = vmatmul.mubr.bf16.gmra.mrb[0].mxu0 %v72
  %v210 = vpop.f32.mrb[0].mxu0
  %v211 = vadd.f32 0.0, %v210
  %v212 = vpop.f32.mrb[0].mxu0
  %v213 = vpop.f32.mrb[0].mxu0
  %v214 = vadd.f32 0.0, %v213
  %v215 = vpop.f32.mrb[0].mxu0
  %216 = vmatprep.mubr.bf16.mxu0 %v75
  %217 = vmatmul.mubr.bf16.gmra.mrb[0].mxu0 %v74
  %v218 = vpop.f32.mrb[0].mxu0
  %v219 = vadd.f32 0.0, %v218
  %v220 = vpop.f32.mrb[0].mxu0
  %v221 = vpop.f32.mrb[0].mxu0
  %v222 = vadd.f32 0.0, %v221
  %v223 = vpop.f32.mrb[0].mxu0
  %224 = vdwg.mxu0
  %v225 = vadd.f32 %v20, %v211
  %v226 = vadd.f32 %v21, %v214
  %v227 = vadd.f32 %v22, %v219
  %v228 = vadd.f32 %v23, %v222
  %229 = vst [vmem:[#allocation2] sm:$0xff] %v225
  %230 = vst [vmem:[#allocation2 + $0x8] sm:$0xff] %v226
  %231 = vst [vmem:[#allocation2 + $0x10] sm:$0xff] %v227
  %232 = vst [vmem:[#allocation2 + $0x18] sm:$0xff] %v228
  // Predicated region
  $region14: #{fwd.13} parent=0 // pred_check
    %p233 = pneg %p12
  $region15: #{fwd.13} parent=0 // pred_check_branch
    %235 = sbr.rel (%p233) target = $region17
  $region16: #{fwd.13} parent=0 // pred_region
    %v236 = vld [vmem:[#allocation2] sm:$0xff]
    %v237 = vld [vmem:[#allocation2 + $0x8] sm:$0xff]
    %v238 = vld [vmem:[#allocation2 + $0x10] sm:$0xff]
    %v239 = vld [vmem:[#allocation2 + $0x18] sm:$0xff]
    %v240 = vadd.f32 %v236, %v237
    %v241 = vadd.f32 %v240, %v238
    %v242 = vadd.f32 %v241, %v239
    %v243 = vrot.slane %v242, 4
    %v244 = vadd.f32 %v242, %v243
    %v245 = vrot.slane %v244, 2
    %v246 = vadd.f32 %v244, %v245
    %v247 = vrot.slane %v246, 1
    %v248 = vadd.f32 %v246, %v247
    %v249 = vmul.f32 %v236, %v236
    %v250 = vmul.f32 %v237, %v237
    %v251 = vmul.f32 %v238, %v238
    %v252 = vmul.f32 %v239, %v239
    %v253 = vadd.f32 %v249, %v250
    %v254 = vadd.f32 %v253, %v251
    %v255 = vadd.f32 %v254, %v252
    %v256 = vrot.slane %v255, 4
    %v257 = vadd.f32 %v255, %v256
    %v258 = vrot.slane %v257, 2
    %v259 = vadd.f32 %v257, %v258
    %v260 = vrot.slane %v259, 1
    %v261 = vadd.f32 %v259, %v260
    %263 = vrot.lane.b32.xlu0 %v248, 96
    %v264 = vpop.permute.xlu0 %263
    %v266 = vadd.f32 %v248, %v264
    %267 = vrot.lane.b32.xlu0 %v248, 64
    %v268 = vpop.permute.xlu0 %267
    %v270 = vadd.f32 %v266, %v268
    %271 = vrot.lane.b32.xlu0 %v248, 32
    %v272 = vpop.permute.xlu0 %271
    %v274 = vadd.f32 %v270, %v272
    %276 = vrot.lane.b32.xlu0 %v274, 32
    %v277 = vpop.permute.xlu0 %276
    %279 = vrot.lane.b32.xlu0 %v274, 64
    %v280 = vpop.permute.xlu0 %279
    %282 = vrot.lane.b32.xlu0 %v274, 96
    %v283 = vpop.permute.xlu0 %282
    %vm285 = vcmask 261120
    %v286 = vsel %vm285, %v274, %v277
    %vm287 = vcmask 523264
    %v288 = vsel %vm287, %v286, %v280
    %vm289 = vcmask 785408
    %v290 = vsel %vm289, %v288, %v283
    %292 = vrot.lane.b32.xlu0 %v261, 96
    %v293 = vpop.permute.xlu0 %292
    %v295 = vadd.f32 %v261, %v293
    %296 = vrot.lane.b32.xlu0 %v261, 64
    %v297 = vpop.permute.xlu0 %296
    %v299 = vadd.f32 %v295, %v297
    %300 = vrot.lane.b32.xlu0 %v261, 32
    %v301 = vpop.permute.xlu0 %300
    %v303 = vadd.f32 %v299, %v301
    %305 = vrot.lane.b32.xlu0 %v303, 32
    %v306 = vpop.permute.xlu0 %305
    %308 = vrot.lane.b32.xlu0 %v303, 64
    %v309 = vpop.permute.xlu0 %308
    %311 = vrot.lane.b32.xlu0 %v303, 96
    %v312 = vpop.permute.xlu0 %311
    %v314 = vsel %vm285, %v303, %v306
    %v315 = vsel %vm287, %v314, %v309
    %v316 = vsel %vm289, %v315, %v312
    %v317 = vmul.f32 %v290, 0.0078125
    %v318 = vmul.f32 %v316, 0.0078125
    %v319 = vmul.f32 %v317, %v317
    %v320 = vsub.f32 %v318, %v319
    %v321 = vmax.f32 %v320, 0.0
    %v322 = vlaneseq
    %v323 = vshrl.u32 %v322, 7
    %v324 = vsub.s32 0, %v323
    %v325 = vrot.slane %v317, %v324
    %v326 = vsub.f32 %v236, %v325
    %v327 = vsub.f32 %v237, %v325
    %v328 = vsub.f32 %v238, %v325
    %v329 = vsub.f32 %v239, %v325
    %v330 = vadd.f32 %v321, 1e-05
    %v331 = vrsqrt.pop %v330
    %v332 = vlaneseq
    %v333 = vshrl.u32 %v332, 7
    %v334 = vsub.s32 0, %v333
    %v335 = vrot.slane %v331, %v334
    %v336 = vmul.f32 %v326, %v335
    %v337 = vmul.f32 %v327, %v335
    %v338 = vmul.f32 %v328, %v335
    %v339 = vmul.f32 %v329, %v335
    %v340 = vmax.f32 %v336, 0.0
    %v341 = vmax.f32 %v337, 0.0
    %v342 = vmax.f32 %v338, 0.0
    %v343 = vmax.f32 %v339, 0.0
    %v344 = vpack.c.bf16 %v341, %v340
    %v345 = vpack.c.bf16 %v343, %v342
    %v348 = vunpack.c.l.b16 %v344
    %v349 = vunpack.c.h.b16 %v344
    %v350 = vunpack.c.l.b16 %v345
    %v351 = vunpack.c.h.b16 %v345
    %v352 = vpack.c.b16 %v348, %v348
    %v353 = vpack.c.b16 %v349, %v349
    %v354 = vpack.c.b16 %v350, %v350
    %v355 = vpack.c.b16 %v351, %v351
    %360 = vst [vmem:[%s2] sm:$0xf] %v352
    %361 = vst [vmem:[%s2 + $0x4] sm:$0xf] %v353
    %362 = vst [vmem:[%s2 + $0x8] sm:$0xf] %v354
    %363 = vst [vmem:[%s2 + $0xc] sm:$0xf] %v355
  $region17: #{fwd.13} parent=0 // pred_fallthru
    _
  // Predicated region
  $region18: #{fwd.13} parent=0 // pred_check
    _
  $region19: #{fwd.13} parent=0 // pred_check_branch
    %365 = sbr.rel (0) target = $region21
  $region20: #{fwd.13} parent=0 // pred_region
    _
  $region21: #{fwd.13} parent=0 // pred_fallthru
    _
  // Predicated region
  $region22: #{fwd.13} parent=0 // pred_check
    _
  $region23: #{fwd.13} parent=0 // pred_check_branch
    %367 = sbr.rel (0) target = $region25
  $region24: #{fwd.13} parent=0 // pred_region
    _
  $region25: #{fwd.13} parent=0 // pred_fallthru
    _

// kernel: fwd.14
$region0: #{fwd.14}
  #allocation0 [shape = 'u32[]', space=smem, size = 0x4, offset = 0x4, fixed_abs, tag = 'smem constant byte address 0x4 - core index']
  #allocation1 [shape = 'u32[144,128]{1,0:T(1,128)}', space=vmem, size = 0x12000, scoped, tag = 'internal scratch']
  #allocation2 [shape = 'f32[128,128]{1,0:T(8,128)}', space=vmem, size = 0x10000, scoped, tag = 'scratch operand']
  %s0 = inlined_call_operand.vmem [shape: bf16[128,128], index: 0, kind: input, shape index: {}]
  %s1 = inlined_call_operand.vmem [shape: bf16[128,128], index: 1, kind: input, shape index: {}]
  %s2 = inlined_call_operand.vmem [shape: f32[128,128], index: 2, kind: output, shape index: {}]
  %s3 = sld [smem:[#allocation0]]
  $region26: #{fwd.14} parent=0
    _
  %s5 = ssub.s32 1, %s3
  %s6 = scalar_select 0, %s5, %s3
  // Predicated region
  $region2: #{fwd.14} parent=0 // pred_check
    _
  $region3: #{fwd.14} parent=0 // pred_check_branch
    %8 = sbr.rel (0) target = $region5
  $region4: #{fwd.14} parent=0 // pred_region
    _
  $region5: #{fwd.14} parent=0 // pred_fallthru
    _
  // Predicated region
  $region6: #{fwd.14} parent=0 // pred_check
    _
  $region7: #{fwd.14} parent=0 // pred_check_branch
    %10 = sbr.rel (0) target = $region9
  $region8: #{fwd.14} parent=0 // pred_region
    _
  $region9: #{fwd.14} parent=0 // pred_fallthru
    _
  %p12 = scmp.eq.s32.totalorder 0, 0
  // Predicated region
  $region10: #{fwd.14} parent=0 // pred_check
    %p13 = pneg %p12
  $region11: #{fwd.14} parent=0 // pred_check_branch
    %15 = sbr.rel (%p13) target = $region13
  $region12: #{fwd.14} parent=0 // pred_region
    %16 = vst [vmem:[#allocation2] sm:$0xff] 0.0
    %17 = vst [vmem:[#allocation2 + $0x8] sm:$0xff] 0.0
    %18 = vst [vmem:[#allocation2 + $0x10] sm:$0xff] 0.0
    %19 = vst [vmem:[#allocation2 + $0x18] sm:$0xff] 0.0
    %20 = vst [vmem:[#allocation2 + $0x20] sm:$0xff] 0.0
    %21 = vst [vmem:[#allocation2 + $0x28] sm:$0xff] 0.0
    %22 = vst [vmem:[#allocation2 + $0x30] sm:$0xff] 0.0
    %23 = vst [vmem:[#allocation2 + $0x38] sm:$0xff] 0.0
    %24 = vst [vmem:[#allocation2 + $0x40] sm:$0xff] 0.0
    %25 = vst [vmem:[#allocation2 + $0x48] sm:$0xff] 0.0
    %26 = vst [vmem:[#allocation2 + $0x50] sm:$0xff] 0.0
    %27 = vst [vmem:[#allocation2 + $0x58] sm:$0xff] 0.0
    %28 = vst [vmem:[#allocation2 + $0x60] sm:$0xff] 0.0
    %29 = vst [vmem:[#allocation2 + $0x68] sm:$0xff] 0.0
    %30 = vst [vmem:[#allocation2 + $0x70] sm:$0xff] 0.0
    %31 = vst [vmem:[#allocation2 + $0x78] sm:$0xff] 0.0
  $region13: #{fwd.14} parent=0 // pred_fallthru
    _
  %v32 = vld [vmem:[#allocation2] sm:$0xff]
  %v33 = vld [vmem:[#allocation2 + $0x8] sm:$0xff]
  %v34 = vld [vmem:[#allocation2 + $0x10] sm:$0xff]
  %v35 = vld [vmem:[#allocation2 + $0x18] sm:$0xff]
  %v36 = vld [vmem:[#allocation2 + $0x20] sm:$0xff]
  %v37 = vld [vmem:[#allocation2 + $0x28] sm:$0xff]
  %v38 = vld [vmem:[#allocation2 + $0x30] sm:$0xff]
  %v39 = vld [vmem:[#allocation2 + $0x38] sm:$0xff]
  %v40 = vld [vmem:[#allocation2 + $0x40] sm:$0xff]
  %v41 = vld [vmem:[#allocation2 + $0x48] sm:$0xff]
  %v42 = vld [vmem:[#allocation2 + $0x50] sm:$0xff]
  %v43 = vld [vmem:[#allocation2 + $0x58] sm:$0xff]
  %v44 = vld [vmem:[#allocation2 + $0x60] sm:$0xff]
  %v45 = vld [vmem:[#allocation2 + $0x68] sm:$0xff]
  %v46 = vld [vmem:[#allocation2 + $0x70] sm:$0xff]
  %v47 = vld [vmem:[#allocation2 + $0x78] sm:$0xff]
  %v48 = vld [vmem:[%s0] sm:$0xf]
  %v49 = vld [vmem:[%s0 + $0x4] sm:$0xf]
  %v50 = vld [vmem:[%s0 + $0x8] sm:$0xf]
  %v51 = vld [vmem:[%s0 + $0xc] sm:$0xf]
  %v52 = vld [vmem:[%s0 + $0x10] sm:$0xf]
  %v53 = vld [vmem:[%s0 + $0x14] sm:$0xf]
  %v54 = vld [vmem:[%s0 + $0x18] sm:$0xf]
  %v55 = vld [vmem:[%s0 + $0x1c] sm:$0xf]
  %v56 = vld [vmem:[%s0 + $0x20] sm:$0xf]
  %v57 = vld [vmem:[%s0 + $0x24] sm:$0xf]
  %v58 = vld [vmem:[%s0 + $0x28] sm:$0xf]
  %v59 = vld [vmem:[%s0 + $0x2c] sm:$0xf]
  %v60 = vld [vmem:[%s0 + $0x30] sm:$0xf]
  %v61 = vld [vmem:[%s0 + $0x34] sm:$0xf]
  %v62 = vld [vmem:[%s0 + $0x38] sm:$0xf]
  %v63 = vld [vmem:[%s0 + $0x3c] sm:$0xf]
  %v64 = vld [vmem:[%s1] sm:$0xf]
  %v65 = vld [vmem:[%s1 + $0x4] sm:$0xf]
  %v66 = vld [vmem:[%s1 + $0x8] sm:$0xf]
  %v67 = vld [vmem:[%s1 + $0xc] sm:$0xf]
  %v68 = vld [vmem:[%s1 + $0x10] sm:$0xf]
  %v69 = vld [vmem:[%s1 + $0x14] sm:$0xf]
  %v70 = vld [vmem:[%s1 + $0x18] sm:$0xf]
  %v71 = vld [vmem:[%s1 + $0x1c] sm:$0xf]
  %v72 = vld [vmem:[%s1 + $0x20] sm:$0xf]
  %v73 = vld [vmem:[%s1 + $0x24] sm:$0xf]
  %v74 = vld [vmem:[%s1 + $0x28] sm:$0xf]
  %v75 = vld [vmem:[%s1 + $0x2c] sm:$0xf]
  %v76 = vld [vmem:[%s1 + $0x30] sm:$0xf]
  %v77 = vld [vmem:[%s1 + $0x34] sm:$0xf]
  %v78 = vld [vmem:[%s1 + $0x38] sm:$0xf]
  %v79 = vld [vmem:[%s1 + $0x3c] sm:$0xf]
  %v96 = vunpack.c.l.b16 %v48
  %v97 = vunpack.c.l.b16 %v49
  %v98 = vunpack.c.l.b16 %v50
  %v99 = vunpack.c.l.b16 %v51
  %v100 = vunpack.c.l.b16 %v52
  %v101 = vunpack.c.l.b16 %v53
  %v102 = vunpack.c.l.b16 %v54
  %v103 = vunpack.c.l.b16 %v55
  %v104 = vunpack.c.l.b16 %v56
  %v105 = vunpack.c.l.b16 %v57
  %v106 = vunpack.c.l.b16 %v58
  %v107 = vunpack.c.l.b16 %v59
  %v108 = vunpack.c.l.b16 %v60
  %v109 = vunpack.c.l.b16 %v61
  %v110 = vunpack.c.l.b16 %v62
  %v111 = vunpack.c.l.b16 %v63
  %v112 = vpack.c.b16 %v97, %v96
  %v113 = vpack.c.b16 %v99, %v98
  %v114 = vpack.c.b16 %v101, %v100
  %v115 = vpack.c.b16 %v103, %v102
  %v116 = vpack.c.b16 %v105, %v104
  %v117 = vpack.c.b16 %v107, %v106
  %v118 = vpack.c.b16 %v109, %v108
  %v119 = vpack.c.b16 %v111, %v110
  %v144 = vunpack.c.l.b16 %v64
  %v145 = vunpack.c.l.b16 %v65
  %v146 = vunpack.c.l.b16 %v66
  %v147 = vunpack.c.l.b16 %v67
  %v148 = vunpack.c.l.b16 %v68
  %v149 = vunpack.c.l.b16 %v69
  %v150 = vunpack.c.l.b16 %v70
  %v151 = vunpack.c.l.b16 %v71
  %v152 = vunpack.c.l.b16 %v72
  %v153 = vunpack.c.l.b16 %v73
  %v154 = vunpack.c.l.b16 %v74
  %v155 = vunpack.c.l.b16 %v75
  %v156 = vunpack.c.l.b16 %v76
  %v157 = vunpack.c.l.b16 %v77
  %v158 = vunpack.c.l.b16 %v78
  %v159 = vunpack.c.l.b16 %v79
  %v160 = vpack.c.b16 %v145, %v144
  %v161 = vpack.c.b16 %v147, %v146
  %v162 = vpack.c.b16 %v149, %v148
  %v163 = vpack.c.b16 %v151, %v150
  %v164 = vpack.c.b16 %v153, %v152
  %v165 = vpack.c.b16 %v155, %v154
  %v166 = vpack.c.b16 %v157, %v156
  %v167 = vpack.c.b16 %v159, %v158
  %176 = vmatprep.subr.bf16.mxu0 0
  %177 = vmatpush1.bf16.msra.mxu0 %v160
  %178 = vmatprep.subr.bf16.mxu0 0
  %179 = vmatpush1.bf16.msra.mxu0 %v161
  %180 = vmatprep.subr.bf16.mxu0 0
  %181 = vmatpush1.bf16.msra.mxu0 %v162
  %182 = vmatprep.subr.bf16.mxu0 0
  %183 = vmatpush1.bf16.msra.mxu0 %v163
  %184 = vmatprep.subr.bf16.mxu0 0
  %185 = vmatpush1.bf16.msra.mxu0 %v164
  %186 = vmatprep.subr.bf16.mxu0 0
  %187 = vmatpush1.bf16.msra.mxu0 %v165
  %188 = vmatprep.subr.bf16.mxu0 0
  %189 = vmatpush1.bf16.msra.mxu0 %v166
  %190 = vmatprep.subr.bf16.mxu0 0
  %191 = vmatpush1.bf16.msra.mxu0 %v167
  %192 = vmatprep.subr.bf16.mxu0 0
  %193 = vmatpush1.bf16.msra.mxu0 0
  %194 = vmatprep.subr.bf16.mxu0 0
  %195 = vmatpush1.bf16.msra.mxu0 0
  %196 = vmatprep.subr.bf16.mxu0 0
  %197 = vmatpush1.bf16.msra.mxu0 0
  %198 = vmatprep.subr.bf16.mxu0 0
  %199 = vmatpush1.bf16.msra.mxu0 0
  %200 = vmatprep.subr.bf16.mxu0 0
  %201 = vmatpush1.bf16.msra.mxu0 0
  %202 = vmatprep.subr.bf16.mxu0 0
  %203 = vmatpush1.bf16.msra.mxu0 0
  %204 = vmatprep.subr.bf16.mxu0 0
  %205 = vmatpush1.bf16.msra.mxu0 0
  %206 = vmatprep.subr.bf16.mxu0 0
  %207 = vmatpush1.bf16.msra.mxu0 0
  %208 = vmatprep.mubr.bf16.mxu0 0
  %209 = vmatmul.mubr.bf16.gmra.mrb[0].mxu0 %v112
  %v210 = vpop.f32.mrb[0].mxu0
  %v211 = vadd.f32 0.0, %v210
  %v212 = vpop.f32.mrb[0].mxu0
  %v213 = vpop.f32.mrb[0].mxu0
  %v214 = vadd.f32 0.0, %v213
  %v215 = vpop.f32.mrb[0].mxu0
  %216 = vmatprep.mubr.bf16.mxu0 0
  %217 = vmatmul.mubr.bf16.gmra.mrb[0].mxu0 %v113
  %v218 = vpop.f32.mrb[0].mxu0
  %v219 = vadd.f32 0.0, %v218
  %v220 = vpop.f32.mrb[0].mxu0
  %v221 = vpop.f32.mrb[0].mxu0
  %v222 = vadd.f32 0.0, %v221
  %v223 = vpop.f32.mrb[0].mxu0
  %224 = vmatprep.mubr.bf16.mxu0 0
  %225 = vmatmul.mubr.bf16.gmra.mrb[0].mxu0 %v114
  %v226 = vpop.f32.mrb[0].mxu0
  %v227 = vadd.f32 0.0, %v226
  %v228 = vpop.f32.mrb[0].mxu0
  %v229 = vpop.f32.mrb[0].mxu0
  %v230 = vadd.f32 0.0, %v229
  %v231 = vpop.f32.mrb[0].mxu0
  %232 = vmatprep.mubr.bf16.mxu0 0
  %233 = vmatmul.mubr.bf16.gmra.mrb[0].mxu0 %v115
  %v234 = vpop.f32.mrb[0].mxu0
  %v235 = vadd.f32 0.0, %v234
  %v236 = vpop.f32.mrb[0].mxu0
  %v237 = vpop.f32.mrb[0].mxu0
  %v238 = vadd.f32 0.0, %v237
  %v239 = vpop.f32.mrb[0].mxu0
  %240 = vmatprep.mubr.bf16.mxu0 0
  %241 = vmatmul.mubr.bf16.gmra.mrb[0].mxu0 %v116
  %v242 = vpop.f32.mrb[0].mxu0
  %v243 = vadd.f32 0.0, %v242
  %v244 = vpop.f32.mrb[0].mxu0
  %v245 = vpop.f32.mrb[0].mxu0
  %v246 = vadd.f32 0.0, %v245
  %v247 = vpop.f32.mrb[0].mxu0
  %248 = vmatprep.mubr.bf16.mxu0 0
  %249 = vmatmul.mubr.bf16.gmra.mrb[0].mxu0 %v117
  %v250 = vpop.f32.mrb[0].mxu0
  %v251 = vadd.f32 0.0, %v250
  %v252 = vpop.f32.mrb[0].mxu0
  %v253 = vpop.f32.mrb[0].mxu0
  %v254 = vadd.f32 0.0, %v253
  %v255 = vpop.f32.mrb[0].mxu0
  %256 = vmatprep.mubr.bf16.mxu0 0
  %257 = vmatmul.mubr.bf16.gmra.mrb[0].mxu0 %v118
  %v258 = vpop.f32.mrb[0].mxu0
  %v259 = vadd.f32 0.0, %v258
  %v260 = vpop.f32.mrb[0].mxu0
  %v261 = vpop.f32.mrb[0].mxu0
  %v262 = vadd.f32 0.0, %v261
  %v263 = vpop.f32.mrb[0].mxu0
  %264 = vmatprep.mubr.bf16.mxu0 0
  %265 = vmatmul.mubr.bf16.gmra.mrb[0].mxu0 %v119
  %v266 = vpop.f32.mrb[0].mxu0
  %v267 = vadd.f32 0.0, %v266
  %v268 = vpop.f32.mrb[0].mxu0
  %v269 = vpop.f32.mrb[0].mxu0
  %v270 = vadd.f32 0.0, %v269
  %v271 = vpop.f32.mrb[0].mxu0
  %272 = vdwg.mxu0
  %v273 = vadd.f32 %v32, %v211
  %v274 = vadd.f32 %v33, %v214
  %v275 = vadd.f32 %v34, %v219
  %v276 = vadd.f32 %v35, %v222
  %v277 = vadd.f32 %v36, %v227
  %v278 = vadd.f32 %v37, %v230
  %v279 = vadd.f32 %v38, %v235
  %v280 = vadd.f32 %v39, %v238
  %v281 = vadd.f32 %v40, %v243
  %v282 = vadd.f32 %v41, %v246
  %v283 = vadd.f32 %v42, %v251
  %v284 = vadd.f32 %v43, %v254
  %v285 = vadd.f32 %v44, %v259
  %v286 = vadd.f32 %v45, %v262
  %v287 = vadd.f32 %v46, %v267
  %v288 = vadd.f32 %v47, %v270
  %289 = vst [vmem:[#allocation2] sm:$0xff] %v273
  %290 = vst [vmem:[#allocation2 + $0x8] sm:$0xff] %v274
  %291 = vst [vmem:[#allocation2 + $0x10] sm:$0xff] %v275
  %292 = vst [vmem:[#allocation2 + $0x18] sm:$0xff] %v276
  %293 = vst [vmem:[#allocation2 + $0x20] sm:$0xff] %v277
  %294 = vst [vmem:[#allocation2 + $0x28] sm:$0xff] %v278
  %295 = vst [vmem:[#allocation2 + $0x30] sm:$0xff] %v279
  %296 = vst [vmem:[#allocation2 + $0x38] sm:$0xff] %v280
  %297 = vst [vmem:[#allocation2 + $0x40] sm:$0xff] %v281
  %298 = vst [vmem:[#allocation2 + $0x48] sm:$0xff] %v282
  %299 = vst [vmem:[#allocation2 + $0x50] sm:$0xff] %v283
  %300 = vst [vmem:[#allocation2 + $0x58] sm:$0xff] %v284
  %301 = vst [vmem:[#allocation2 + $0x60] sm:$0xff] %v285
  %302 = vst [vmem:[#allocation2 + $0x68] sm:$0xff] %v286
  %303 = vst [vmem:[#allocation2 + $0x70] sm:$0xff] %v287
  %304 = vst [vmem:[#allocation2 + $0x78] sm:$0xff] %v288
  // Predicated region
  $region14: #{fwd.14} parent=0 // pred_check
    %p305 = pneg %p12
  $region15: #{fwd.14} parent=0 // pred_check_branch
    %307 = sbr.rel (%p305) target = $region17
  $region16: #{fwd.14} parent=0 // pred_region
    %v308 = vld [vmem:[#allocation2] sm:$0xff]
    %v309 = vld [vmem:[#allocation2 + $0x8] sm:$0xff]
    %v310 = vld [vmem:[#allocation2 + $0x10] sm:$0xff]
    %v311 = vld [vmem:[#allocation2 + $0x18] sm:$0xff]
    %v312 = vld [vmem:[#allocation2 + $0x20] sm:$0xff]
    %v313 = vld [vmem:[#allocation2 + $0x28] sm:$0xff]
    %v314 = vld [vmem:[#allocation2 + $0x30] sm:$0xff]
    %v315 = vld [vmem:[#allocation2 + $0x38] sm:$0xff]
    %v316 = vld [vmem:[#allocation2 + $0x40] sm:$0xff]
    %v317 = vld [vmem:[#allocation2 + $0x48] sm:$0xff]
    %v318 = vld [vmem:[#allocation2 + $0x50] sm:$0xff]
    %v319 = vld [vmem:[#allocation2 + $0x58] sm:$0xff]
    %v320 = vld [vmem:[#allocation2 + $0x60] sm:$0xff]
    %v321 = vld [vmem:[#allocation2 + $0x68] sm:$0xff]
    %v322 = vld [vmem:[#allocation2 + $0x70] sm:$0xff]
    %v323 = vld [vmem:[#allocation2 + $0x78] sm:$0xff]
    %v324 = vtanh.pop %v308
    %v325 = vtanh.pop %v309
    %v326 = vtanh.pop %v310
    %v327 = vtanh.pop %v311
    %v328 = vtanh.pop %v312
    %v329 = vtanh.pop %v313
    %v330 = vtanh.pop %v314
    %v331 = vtanh.pop %v315
    %v332 = vtanh.pop %v316
    %v333 = vtanh.pop %v317
    %v334 = vtanh.pop %v318
    %v335 = vtanh.pop %v319
    %v336 = vtanh.pop %v320
    %v337 = vtanh.pop %v321
    %v338 = vtanh.pop %v322
    %v339 = vtanh.pop %v323
    %340 = vst [vmem:[%s2] sm:$0xff] %v324
    %341 = vst [vmem:[%s2 + $0x8] sm:$0xff] %v325
    %342 = vst [vmem:[%s2 + $0x10] sm:$0xff] %v326
    %343 = vst [vmem:[%s2 + $0x18] sm:$0xff] %v327
    %344 = vst [vmem:[%s2 + $0x20] sm:$0xff] %v328
    %345 = vst [vmem:[%s2 + $0x28] sm:$0xff] %v329
    %346 = vst [vmem:[%s2 + $0x30] sm:$0xff] %v330
    %347 = vst [vmem:[%s2 + $0x38] sm:$0xff] %v331
    %348 = vst [vmem:[%s2 + $0x40] sm:$0xff] %v332
    %349 = vst [vmem:[%s2 + $0x48] sm:$0xff] %v333
    %350 = vst [vmem:[%s2 + $0x50] sm:$0xff] %v334
    %351 = vst [vmem:[%s2 + $0x58] sm:$0xff] %v335
    %352 = vst [vmem:[%s2 + $0x60] sm:$0xff] %v336
    %353 = vst [vmem:[%s2 + $0x68] sm:$0xff] %v337
    %354 = vst [vmem:[%s2 + $0x70] sm:$0xff] %v338
    %355 = vst [vmem:[%s2 + $0x78] sm:$0xff] %v339
  $region17: #{fwd.14} parent=0 // pred_fallthru
    _
  // Predicated region
  $region18: #{fwd.14} parent=0 // pred_check
    _
  $region19: #{fwd.14} parent=0 // pred_check_branch
    %357 = sbr.rel (0) target = $region21
  $region20: #{fwd.14} parent=0 // pred_region
    _
  $region21: #{fwd.14} parent=0 // pred_fallthru
    _
  // Predicated region
  $region22: #{fwd.14} parent=0 // pred_check
    _
  $region23: #{fwd.14} parent=0 // pred_check_branch
    %359 = sbr.rel (0) target = $region25
  $region24: #{fwd.14} parent=0 // pred_region
    _
  $region25: #{fwd.14} parent=0 // pred_fallthru
    _

</llo_original>
